<compile_context>
chip_gen: v7x
topology: tpu7x:2x2x1
jax: 0.10.0
libtpu: 0.0.40
codegen_flags: <defaults>
</compile_context>

<pallas_src>
import functools

import jax
import jax.numpy as jnp
import numpy as np
from jax.experimental import pallas as pl
from jax.experimental.pallas import tpu as pltpu


def _vmem_limit_bytes():
    """75% of physical VMEM (48 MiB fallback keeps headroom on v7x's 64 MiB)."""
    try:
        cap = int(pltpu.get_tpu_info().vmem_capacity_bytes)
    except Exception:
        cap = 64 * 1024 * 1024
    return (cap * 3) // 4


_VMEM_LIMIT = _vmem_limit_bytes()


def _row_tile(n, row_bytes, budget):
    """Largest row tile dividing n whose double-buffered footprint fits budget."""
    for tm in (1024, 512, 256, 128, 64, 32, 16, 8):
        if n % tm == 0 and 2 * tm * row_bytes <= budget:
            return tm
    return n  # single block (block dim == full array dim is always legal)


def _q_tile(lq):
    """Lq tile for the attention grid (>=128 so MXU M-dim stays filled)."""
    for tq in (256, 128):
        if lq % tq == 0:
            return tq
    return lq


# ---------------------------------------------------------------------------
# Kernel 1: fused Q/K/V projections  (y = x @ W^T + b for three inputs at once)
# Weights are bf16 and resident (constant block index); activations pipelined.
# ---------------------------------------------------------------------------
def _qkv_proj_kernel(xq_ref, xk_ref, xv_ref, wq_ref, wk_ref, wv_ref,
                     bq_ref, bk_ref, bv_ref, q_out, k_out, v_out):
    def proj(x_ref, w_ref, b_ref, o_ref):
        x = x_ref[...].astype(jnp.bfloat16)
        o_ref[...] = (
            jnp.dot(x, w_ref[...], preferred_element_type=jnp.float32)
            + b_ref[...]
        ).astype(o_ref.dtype)

    proj(xq_ref, wq_ref, bq_ref, q_out)
    proj(xk_ref, wk_ref, bk_ref, k_out)
    proj(xv_ref, wv_ref, bv_ref, v_out)


def pallas_qkv_projection(xq, xk, xv, wq_t, wk_t, wv_t, bq, bk, bv):
    n, d_model = xq.shape
    d_qk = wq_t.shape[1]
    d_v = wv_t.shape[1]

    # TODO(synk): for very large d_model add a K grid axis with an f32 VMEM
    # accumulator instead of holding full resident weights (v7x 64 MiB).
    weight_bytes = (2 * d_model * d_qk + d_model * d_v) * 2  # bf16, resident
    budget = max(_VMEM_LIMIT - 2 * weight_bytes, _VMEM_LIMIT // 4)
    row_bytes = 3 * d_model * 4 + (2 * d_qk + d_v) * 2  # f32 in, bf16 out
    tm = _row_tile(n, row_bytes, budget)

    row_spec = pl.BlockSpec((tm, d_model), lambda i: (i, 0))
    wqk_spec = pl.BlockSpec((d_model, d_qk), lambda i: (0, 0))   # resident
    wv_spec = pl.BlockSpec((d_model, d_v), lambda i: (0, 0))     # resident
    bqk_spec = pl.BlockSpec((1, d_qk), lambda i: (0, 0))
    bv_spec = pl.BlockSpec((1, d_v), lambda i: (0, 0))
    oqk_spec = pl.BlockSpec((tm, d_qk), lambda i: (i, 0))
    ov_spec = pl.BlockSpec((tm, d_v), lambda i: (i, 0))

    return pl.pallas_call(
        _qkv_proj_kernel,
        out_shape=(
            jax.ShapeDtypeStruct((n, d_qk), jnp.bfloat16),
            jax.ShapeDtypeStruct((n, d_qk), jnp.bfloat16),
            jax.ShapeDtypeStruct((n, d_v), jnp.bfloat16),
        ),
        grid=(n // tm,),
        in_specs=[row_spec, row_spec, row_spec,
                  wqk_spec, wqk_spec, wv_spec,
                  bqk_spec, bqk_spec, bv_spec],
        out_specs=(oqk_spec, oqk_spec, ov_spec),
        compiler_params=pltpu.CompilerParams(
            dimension_semantics=("parallel",),
            vmem_limit_bytes=_VMEM_LIMIT,
        ),
    )(xq, xk, xv, wq_t, wk_t, wv_t,
      bq.reshape(1, d_qk), bk.reshape(1, d_qk), bv.reshape(1, d_v))


# ---------------------------------------------------------------------------
# Kernel 1b: generic row-tiled linear (fallback for cross-attention where
# q / k / v sequence lengths differ and the fused call cannot share one grid)
# ---------------------------------------------------------------------------
def _linear_kernel(x_ref, wt_ref, b_ref, o_ref):
    x = x_ref[...].astype(jnp.bfloat16)
    o_ref[...] = (
        jnp.dot(x, wt_ref[...], preferred_element_type=jnp.float32) + b_ref[...]
    ).astype(o_ref.dtype)


def pallas_linear(x2d, w_t, b):
    n, d_in = x2d.shape
    d_out = w_t.shape[1]
    weight_bytes = d_in * d_out * 2
    budget = max(_VMEM_LIMIT - 2 * weight_bytes, _VMEM_LIMIT // 4)
    tm = _row_tile(n, d_in * 4 + d_out * 2, budget)
    return pl.pallas_call(
        _linear_kernel,
        out_shape=jax.ShapeDtypeStruct((n, d_out), jnp.bfloat16),
        grid=(n // tm,),
        in_specs=[pl.BlockSpec((tm, d_in), lambda i: (i, 0)),
                  pl.BlockSpec((d_in, d_out), lambda i: (0, 0)),
                  pl.BlockSpec((1, d_out), lambda i: (0, 0))],
        out_specs=pl.BlockSpec((tm, d_out), lambda i: (i, 0)),
        compiler_params=pltpu.CompilerParams(
            dimension_semantics=("parallel",),
            vmem_limit_bytes=_VMEM_LIMIT,
        ),
    )(x2d, w_t, b.reshape(1, d_out))


# ---------------------------------------------------------------------------
# Kernel 2: scaled dot-product attention.  Grid = (batch, Lq tiles); all heads
# of one (batch, Lq-tile) block are computed per step directly from the
# [L, H*D] projection layout (no wrapper transposes); results are stored
# per-head straight into the [tq, H*Dv] concat layout the fc layer consumes.
# ---------------------------------------------------------------------------
def _attention_kernel(q_ref, k_ref, v_ref, m_ref, o_ref, *rest,
                      n_head, d_k, d_v, inv_scale, return_attn):
    # q_ref: [tq, H*Dk]  k_ref: [Lk, H*Dk]  v_ref: [Lk, H*Dv]  (bf16, batch squeezed)
    # m_ref: [tq, Lk] int8 (nonzero == masked position)
    # o_ref: [tq, H*Dv] bf16   a_ref (optional): [H, tq, Lk] f32
    if return_attn:
        (a_ref,) = rest

    mask = m_ref[...] != 0          # computed once, reused by every head
    neg = jnp.float32(-1e30)        # finite -> fully-masked rows stay NaN-free

    for h in range(n_head):
        # fold 1/sqrt(d_k) into the small [tq, d_k] Q operand, not the scores
        q = q_ref[:, h * d_k:(h + 1) * d_k] * inv_scale
        k = k_ref[:, h * d_k:(h + 1) * d_k]
        v = v_ref[:, h * d_v:(h + 1) * d_v]

        # scores = (q/sqrt(d_k)) @ k^T   -- bf16 MXU, f32 accumulation
        s = jax.lax.dot_general(
            q, k, (((1,), (1,)), ((), ())),
            preferred_element_type=jnp.float32)
        s = jnp.where(mask, neg, s)

        # softmax over the key axis (f32 stats, EUP approx reciprocal)
        mx = jnp.max(s, axis=-1, keepdims=True)
        e = jnp.exp(s - mx)
        p = e * pl.reciprocal(jnp.sum(e, axis=-1, keepdims=True), approx=True)

        if return_attn:
            a_ref[h] = p

        # per-head direct store; only one head's result stays live
        o_ref[:, h * d_v:(h + 1) * d_v] = jnp.dot(
            p.astype(jnp.bfloat16), v,
            preferred_element_type=jnp.float32).astype(o_ref.dtype)


def pallas_attention(q_p, k_p, v_p, mask_i8, *, n_head, d_k, d_v,
                     inv_scale, return_attn):
    # TODO(synk): for very long sequences additionally tile Lk with an online-
    # softmax (flash-style) accumulator instead of holding full K/V blocks.
    B, Lq, _ = q_p.shape
    Lk = k_p.shape[1]
    tq = _q_tile(Lq)

    in_specs = [
        pl.BlockSpec((pl.Squeezed(), tq, n_head * d_k), lambda b, qi: (b, qi, 0)),
        pl.BlockSpec((pl.Squeezed(), Lk, n_head * d_k), lambda b, qi: (b, 0, 0)),
        pl.BlockSpec((pl.Squeezed(), Lk, n_head * d_v), lambda b, qi: (b, 0, 0)),
        pl.BlockSpec((pl.Squeezed(), tq, Lk), lambda b, qi: (b, qi, 0)),
    ]
    out_shapes = [jax.ShapeDtypeStruct((B, Lq, n_head * d_v), jnp.bfloat16)]
    out_specs = [pl.BlockSpec((pl.Squeezed(), tq, n_head * d_v),
                              lambda b, qi: (b, qi, 0))]
    if return_attn:
        # written head-major so the (H*B, Lq, Lk) reference view is a free reshape
        out_shapes.append(jax.ShapeDtypeStruct((n_head, B, Lq, Lk), jnp.float32))
        out_specs.append(pl.BlockSpec((n_head, pl.Squeezed(), tq, Lk),
                                      lambda b, qi: (0, b, qi, 0)))

    kernel = functools.partial(
        _attention_kernel, n_head=n_head, d_k=d_k, d_v=d_v,
        inv_scale=inv_scale, return_attn=return_attn)

    results = pl.pallas_call(
        kernel,
        out_shape=tuple(out_shapes),
        grid=(B, Lq // tq),
        in_specs=in_specs,
        out_specs=tuple(out_specs),
        compiler_params=pltpu.CompilerParams(
            dimension_semantics=("parallel", "parallel"),
            vmem_limit_bytes=_VMEM_LIMIT,
        ),
    )(q_p, k_p, v_p, mask_i8)

    if return_attn:
        return results[0], results[1]
    return results[0], None


# ---------------------------------------------------------------------------
# Kernel 3: final projection + residual + LayerNorm (fused, row-tiled)
# ---------------------------------------------------------------------------
def _fc_res_ln_kernel(x_ref, wt_ref, b_ref, res_ref, g_ref, beta_ref, o_ref):
    # x_ref is already bf16 (attention output), weights are bf16
    y = jnp.dot(x_ref[...], wt_ref[...],
                preferred_element_type=jnp.float32) + b_ref[...]
    # TODO(synk): nn.Dropout(p=0.1) on the fc output is identity in eval mode.
    z = y + res_ref[...]
    mean = jnp.mean(z, axis=-1, keepdims=True)
    var = jnp.mean(jnp.square(z - mean), axis=-1, keepdims=True)
    zn = (z - mean) * jax.lax.rsqrt(var + 1e-5)
    o_ref[...] = zn * g_ref[...] + beta_ref[...]


def pallas_fc_residual_ln(x2d, w_fc_t, b_fc, res2d, gamma, beta):
    n, d_in = x2d.shape
    d_model = w_fc_t.shape[1]
    weight_bytes = d_in * d_model * 2
    budget = max(_VMEM_LIMIT - 2 * weight_bytes, _VMEM_LIMIT // 4)
    tm = _row_tile(n, d_in * 2 + d_model * 4 + d_model * 4, budget)
    return pl.pallas_call(
        _fc_res_ln_kernel,
        out_shape=jax.ShapeDtypeStruct((n, d_model), jnp.float32),
        grid=(n // tm,),
        in_specs=[pl.BlockSpec((tm, d_in), lambda i: (i, 0)),
                  pl.BlockSpec((d_in, d_model), lambda i: (0, 0)),
                  pl.BlockSpec((1, d_model), lambda i: (0, 0)),
                  pl.BlockSpec((tm, d_model), lambda i: (i, 0)),
                  pl.BlockSpec((1, d_model), lambda i: (0, 0)),
                  pl.BlockSpec((1, d_model), lambda i: (0, 0))],
        out_specs=pl.BlockSpec((tm, d_model), lambda i: (i, 0)),
        compiler_params=pltpu.CompilerParams(
            dimension_semantics=("parallel",),
            vmem_limit_bytes=_VMEM_LIMIT,
        ),
    )(x2d, w_fc_t, b_fc.reshape(1, d_model), res2d,
      gamma.reshape(1, d_model), beta.reshape(1, d_model))


# ---------------------------------------------------------------------------
# Full MultiHeadAttention forward
# ---------------------------------------------------------------------------
def multi_head_attention(params, q, k, v, mask, *, n_head, d_k, d_v,
                         return_attn=True):
    B, Lq, d_model = q.shape
    Lk = k.shape[1]
    Lv = v.shape[1]
    residual = q

    if Lq == Lk == Lv:
        q_p, k_p, v_p = pallas_qkv_projection(
            q.reshape(B * Lq, d_model),
            k.reshape(B * Lk, d_model),
            v.reshape(B * Lv, d_model),
            params["w_qs_t"], params["w_ks_t"], params["w_vs_t"],
            params["b_qs"], params["b_ks"], params["b_vs"])
    else:  # cross-attention with different lengths: three tiled linear calls
        q_p = pallas_linear(q.reshape(B * Lq, d_model), params["w_qs_t"], params["b_qs"])
        k_p = pallas_linear(k.reshape(B * Lk, d_model), params["w_ks_t"], params["b_ks"])
        v_p = pallas_linear(v.reshape(B * Lv, d_model), params["w_vs_t"], params["b_vs"])

    # [B*L, H*D] -> [B, L, H*D]: free reshapes, NO transposes; head slicing is
    # done inside the attention kernel.
    q_p = q_p.reshape(B, Lq, n_head * d_k)
    k_p = k_p.reshape(B, Lk, n_head * d_k)
    v_p = v_p.reshape(B, Lv, n_head * d_v)

    inv_scale = float(1.0 / np.power(d_k, 0.5))
    mask_i8 = mask.astype(jnp.int8)

    out, attn4 = pallas_attention(
        q_p, k_p, v_p, mask_i8, n_head=n_head, d_k=d_k, d_v=d_v,
        inv_scale=inv_scale, return_attn=return_attn)

    # `out` is already in the [B, Lq, H*Dv] concat layout the fc layer needs.
    out2d = pallas_fc_residual_ln(
        out.reshape(B * Lq, n_head * d_v),
        params["w_fc_t"], params["b_fc"],
        residual.reshape(B * Lq, d_model),
        params["ln_gamma"], params["ln_beta"])

    output = out2d.reshape(B, Lq, d_model)
    attn = None
    if return_attn:
        # [H, B, Lq, Lk] -> [H*B, Lq, Lk]: contiguous, matches reference order
        attn = attn4.reshape(n_head * B, Lq, Lk)
    return output, attn


# ---------------------------------------------------------------------------
# Deterministic parameter construction (shapes/inits from the module __init__).
# Weights are stored pre-transposed ([d_in, d_out]) and in bf16 so kernels
# consume them directly without per-call transposes or per-step casts.
# ---------------------------------------------------------------------------
def init_params(key, n_head, d_model, d_k, d_v):
    ks = jax.random.split(key, 8)
    std_qk = np.sqrt(2.0 / (d_model + d_k))
    std_v = np.sqrt(2.0 / (d_model + d_v))
    std_fc = np.sqrt(2.0 / (n_head * d_v + d_model))  # xavier_normal
    return {
        "w_qs_t": (std_qk * jax.random.normal(ks[0], (d_model, n_head * d_k),
                                              jnp.float32)).astype(jnp.bfloat16),
        "b_qs": 0.01 * jax.random.normal(ks[1], (n_head * d_k,), jnp.float32),
        "w_ks_t": (std_qk * jax.random.normal(ks[2], (d_model, n_head * d_k),
                                              jnp.float32)).astype(jnp.bfloat16),
        "b_ks": 0.01 * jax.random.normal(ks[3], (n_head * d_k,), jnp.float32),
        "w_vs_t": (std_v * jax.random.normal(ks[4], (d_model, n_head * d_v),
                                             jnp.float32)).astype(jnp.bfloat16),
        "b_vs": 0.01 * jax.random.normal(ks[5], (n_head * d_v,), jnp.float32),
        "w_fc_t": (std_fc * jax.random.normal(ks[6], (n_head * d_v, d_model),
                                              jnp.float32)).astype(jnp.bfloat16),
        "b_fc": 0.01 * jax.random.normal(ks[7], (d_model,), jnp.float32),
        "ln_gamma": jnp.ones((d_model,), jnp.float32),
        "ln_beta": jnp.zeros((d_model,), jnp.float32),
    }


if __name__ == "__main__":
    n_head, d_model, d_k, d_v = 4, 32, 8, 8
    B, L = 2, 8

    key = jax.random.PRNGKey(0)
    kp, kq, kk, kv = jax.random.split(key, 4)
    params = init_params(kp, n_head, d_model, d_k, d_v)

    q = jax.random.normal(kq, (B, L, d_model), jnp.float32)
    k = jax.random.normal(kk, (B, L, d_model), jnp.float32)
    v = jax.random.normal(kv, (B, L, d_model), jnp.float32)
    # causal mask: True (masked) above the diagonal, same for both batches
    causal = jnp.triu(jnp.ones((L, L), dtype=bool), k=1)
    mask = jnp.broadcast_to(causal, (B, L, L))

    fwd = jax.jit(functools.partial(
        multi_head_attention, n_head=n_head, d_k=d_k, d_v=d_v))
    output, attn = fwd(params, q, k, v, mask)
    jax.block_until_ready((output, attn))

    assert output.shape == (B, L, d_model)
    assert attn.shape == (n_head * B, L, L)
    assert bool(jnp.all(jnp.isfinite(output)))
    assert bool(jnp.all(jnp.isfinite(attn)))
    print("KERNEL_OK")
</pallas_src>

<mosaic_0001>
module attributes {stable_mosaic.version = 11 : i64} {
  func.func @_fc_res_ln_kernel(%arg0: i32, %arg1: memref<16x32xbf16, #tpu.memory_space<vmem>>, %arg2: memref<32x32xbf16, #tpu.memory_space<vmem>>, %arg3: memref<1x32xf32, #tpu.memory_space<vmem>>, %arg4: memref<16x32xf32, #tpu.memory_space<vmem>>, %arg5: memref<1x32xf32, #tpu.memory_space<vmem>>, %arg6: memref<1x32xf32, #tpu.memory_space<vmem>>, %arg7: memref<16x32xf32, #tpu.memory_space<vmem>>) attributes {dimension_semantics = [#tpu.dimension_semantics<parallel>], iteration_bounds = array<i64: 1>, scalar_prefetch = 0 : i64, scratch_operands = 0 : i64, tpu.core_type = #tpu.core_type<tc>, window_params = [{transform_indices = @transform_0, window_bounds = array<i64: 16, 32>}, {pipeline_mode = #tpu.pipeline_mode<synchronous>, transform_indices = @transform_1, window_bounds = array<i64: 32, 32>}, {pipeline_mode = #tpu.pipeline_mode<synchronous>, transform_indices = @transform_2, window_bounds = array<i64: 1, 32>}, {transform_indices = @transform_3, window_bounds = array<i64: 16, 32>}, {pipeline_mode = #tpu.pipeline_mode<synchronous>, transform_indices = @transform_4, window_bounds = array<i64: 1, 32>}, {pipeline_mode = #tpu.pipeline_mode<synchronous>, transform_indices = @transform_5, window_bounds = array<i64: 1, 32>}, {transform_indices = @transform_6, window_bounds = array<i64: 16, 32>}]} {
    %c0 = arith.constant 0 : index
    %c0_0 = arith.constant 0 : index
    %0 = vector.load %arg1[%c0, %c0_0] : memref<16x32xbf16, #tpu.memory_space<vmem>>, vector<16x32xbf16>
    %c0_1 = arith.constant 0 : index
    %c0_2 = arith.constant 0 : index
    %1 = vector.load %arg2[%c0_1, %c0_2] : memref<32x32xbf16, #tpu.memory_space<vmem>>, vector<32x32xbf16>
    %cst = arith.constant dense<0.000000e+00> : vector<16x32xf32>
    %2 = tpu.matmul %0, %1, %cst {dimension_numbers = #tpu.dot_dimension_numbers<[1], [0], [0], [1], [0, 0, 1, 1], [], []>} : vector<16x32xbf16>, vector<32x32xbf16>, vector<16x32xf32> -> vector<16x32xf32>
    %c0_3 = arith.constant 0 : index
    %c0_4 = arith.constant 0 : index
    %3 = vector.load %arg3[%c0_3, %c0_4] : memref<1x32xf32, #tpu.memory_space<vmem>>, vector<1x32xf32>
    %4 = vector.broadcast %3 : vector<1x32xf32> to vector<16x32xf32>
    %5 = arith.addf %2, %4 : vector<16x32xf32>
    %c0_5 = arith.constant 0 : index
    %c0_6 = arith.constant 0 : index
    %6 = vector.load %arg4[%c0_5, %c0_6] : memref<16x32xf32, #tpu.memory_space<vmem>>, vector<16x32xf32>
    %7 = arith.addf %5, %6 : vector<16x32xf32>
    %cst_7 = arith.constant dense<0.000000e+00> : vector<16xf32>
    %8 = vector.multi_reduction <add>, %7, %cst_7 [1] : vector<16x32xf32> to vector<16xf32>
    %9 = vector.shape_cast %8 : vector<16xf32> to vector<16x1xf32>
    %cst_8 = arith.constant 3.200000e+01 : f32
    %10 = vector.broadcast %cst_8 : f32 to vector<16x1xf32>
    %11 = arith.divf %9, %10 : vector<16x1xf32>
    %12 = vector.broadcast %11 : vector<16x1xf32> to vector<16x32xf32>
    %13 = arith.subf %7, %12 : vector<16x32xf32>
    %14 = arith.mulf %13, %13 : vector<16x32xf32>
    %cst_9 = arith.constant dense<0.000000e+00> : vector<16xf32>
    %15 = vector.multi_reduction <add>, %14, %cst_9 [1] : vector<16x32xf32> to vector<16xf32>
    %16 = vector.shape_cast %15 : vector<16xf32> to vector<16x1xf32>
    %cst_10 = arith.constant 3.200000e+01 : f32
    %17 = vector.broadcast %cst_10 : f32 to vector<16x1xf32>
    %18 = arith.divf %16, %17 : vector<16x1xf32>
    %19 = vector.broadcast %11 : vector<16x1xf32> to vector<16x32xf32>
    %20 = arith.subf %7, %19 : vector<16x32xf32>
    %cst_11 = arith.constant 9.99999974E-6 : f32
    %21 = vector.broadcast %cst_11 : f32 to vector<16x1xf32>
    %22 = arith.addf %18, %21 : vector<16x1xf32>
    %23 = math.rsqrt %22 : vector<16x1xf32>
    %24 = vector.broadcast %23 : vector<16x1xf32> to vector<16x32xf32>
    %25 = arith.mulf %20, %24 : vector<16x32xf32>
    %c0_12 = arith.constant 0 : index
    %c0_13 = arith.constant 0 : index
    %26 = vector.load %arg5[%c0_12, %c0_13] : memref<1x32xf32, #tpu.memory_space<vmem>>, vector<1x32xf32>
    %27 = vector.broadcast %26 : vector<1x32xf32> to vector<16x32xf32>
    %28 = arith.mulf %25, %27 : vector<16x32xf32>
    %c0_14 = arith.constant 0 : index
    %c0_15 = arith.constant 0 : index
    %29 = vector.load %arg6[%c0_14, %c0_15] : memref<1x32xf32, #tpu.memory_space<vmem>>, vector<1x32xf32>
    %30 = vector.broadcast %29 : vector<1x32xf32> to vector<16x32xf32>
    %31 = arith.addf %28, %30 : vector<16x32xf32>
    %c0_16 = arith.constant 0 : index
    %c0_17 = arith.constant 0 : index
    %32 = vector.load %arg7[%c0_16, %c0_17] : memref<16x32xf32, #tpu.memory_space<vmem>>, vector<16x32xf32>
    tpu.vector_store %arg7[%c0_16, %c0_17], %31 {strides = array<i32>} : memref<16x32xf32, #tpu.memory_space<vmem>>, vector<16x32xf32>,
    return
  }
  func.func @transform_0(%arg0: i32) -> (i32, i32) {
    %c0_i32 = arith.constant 0 : i32
    %c0_i32_0 = arith.constant 0 : i32
    return %arg0, %c0_i32 : i32, i32
  }
  func.func @transform_1(%arg0: i32) -> (i32, i32) {
    %c0_i32 = arith.constant 0 : i32
    %c0_i32_0 = arith.constant 0 : i32
    %c0_i32_1 = arith.constant 0 : i32
    return %c0_i32, %c0_i32_0 : i32, i32
  }
  func.func @transform_2(%arg0: i32) -> (i32, i32) {
    %c0_i32 = arith.constant 0 : i32
    %c0_i32_0 = arith.constant 0 : i32
    %c0_i32_1 = arith.constant 0 : i32
    return %c0_i32, %c0_i32_0 : i32, i32
  }
  func.func @transform_3(%arg0: i32) -> (i32, i32) {
    %c0_i32 = arith.constant 0 : i32
    %c0_i32_0 = arith.constant 0 : i32
    return %arg0, %c0_i32 : i32, i32
  }
  func.func @transform_4(%arg0: i32) -> (i32, i32) {
    %c0_i32 = arith.constant 0 : i32
    %c0_i32_0 = arith.constant 0 : i32
    %c0_i32_1 = arith.constant 0 : i32
    return %c0_i32, %c0_i32_0 : i32, i32
  }
  func.func @transform_5(%arg0: i32) -> (i32, i32) {
    %c0_i32 = arith.constant 0 : i32
    %c0_i32_0 = arith.constant 0 : i32
    %c0_i32_1 = arith.constant 0 : i32
    return %c0_i32, %c0_i32_0 : i32, i32
  }
  func.func @transform_6(%arg0: i32) -> (i32, i32) {
    %c0_i32 = arith.constant 0 : i32
    %c0_i32_0 = arith.constant 0 : i32
    return %arg0, %c0_i32 : i32, i32
  }
}

module attributes {stable_mosaic.version = 11 : i64} {
  func.func @_qkv_proj_kernel(%arg0: i32, %arg1: memref<16x32xf32, #tpu.memory_space<vmem>>, %arg2: memref<16x32xf32, #tpu.memory_space<vmem>>, %arg3: memref<16x32xf32, #tpu.memory_space<vmem>>, %arg4: memref<32x32xbf16, #tpu.memory_space<vmem>>, %arg5: memref<32x32xbf16, #tpu.memory_space<vmem>>, %arg6: memref<32x32xbf16, #tpu.memory_space<vmem>>, %arg7: memref<1x32xf32, #tpu.memory_space<vmem>>, %arg8: memref<1x32xf32, #tpu.memory_space<vmem>>, %arg9: memref<1x32xf32, #tpu.memory_space<vmem>>, %arg10: memref<16x32xbf16, #tpu.memory_space<vmem>>, %arg11: memref<16x32xbf16, #tpu.memory_space<vmem>>, %arg12: memref<16x32xbf16, #tpu.memory_space<vmem>>) attributes {dimension_semantics = [#tpu.dimension_semantics<parallel>], iteration_bounds = array<i64: 1>, scalar_prefetch = 0 : i64, scratch_operands = 0 : i64, tpu.core_type = #tpu.core_type<tc>, window_params = [{transform_indices = @transform_0, window_bounds = array<i64: 16, 32>}, {transform_indices = @transform_1, window_bounds = array<i64: 16, 32>}, {transform_indices = @transform_2, window_bounds = array<i64: 16, 32>}, {pipeline_mode = #tpu.pipeline_mode<synchronous>, transform_indices = @transform_3, window_bounds = array<i64: 32, 32>}, {pipeline_mode = #tpu.pipeline_mode<synchronous>, transform_indices = @transform_4, window_bounds = array<i64: 32, 32>}, {pipeline_mode = #tpu.pipeline_mode<synchronous>, transform_indices = @transform_5, window_bounds = array<i64: 32, 32>}, {pipeline_mode = #tpu.pipeline_mode<synchronous>, transform_indices = @transform_6, window_bounds = array<i64: 1, 32>}, {pipeline_mode = #tpu.pipeline_mode<synchronous>, transform_indices = @transform_7, window_bounds = array<i64: 1, 32>}, {pipeline_mode = #tpu.pipeline_mode<synchronous>, transform_indices = @transform_8, window_bounds = array<i64: 1, 32>}, {transform_indices = @transform_9, window_bounds = array<i64: 16, 32>}, {transform_indices = @transform_10, window_bounds = array<i64: 16, 32>}, {transform_indices = @transform_11, window_bounds = array<i64: 16, 32>}]} {
    %c0 = arith.constant 0 : index
    %c0_0 = arith.constant 0 : index
    %0 = vector.load %arg1[%c0, %c0_0] : memref<16x32xf32, #tpu.memory_space<vmem>>, vector<16x32xf32>
    %1 = arith.truncf %0 : vector<16x32xf32> to vector<16x32xbf16>
    %c0_1 = arith.constant 0 : index
    %c0_2 = arith.constant 0 : index
    %2 = vector.load %arg4[%c0_1, %c0_2] : memref<32x32xbf16, #tpu.memory_space<vmem>>, vector<32x32xbf16>
    %cst = arith.constant dense<0.000000e+00> : vector<16x32xf32>
    %3 = tpu.matmul %1, %2, %cst {dimension_numbers = #tpu.dot_dimension_numbers<[1], [0], [0], [1], [0, 0, 1, 1], [], []>} : vector<16x32xbf16>, vector<32x32xbf16>, vector<16x32xf32> -> vector<16x32xf32>
    %c0_3 = arith.constant 0 : index
    %c0_4 = arith.constant 0 : index
    %4 = vector.load %arg7[%c0_3, %c0_4] : memref<1x32xf32, #tpu.memory_space<vmem>>, vector<1x32xf32>
    %5 = vector.broadcast %4 : vector<1x32xf32> to vector<16x32xf32>
    %6 = arith.addf %3, %5 : vector<16x32xf32>
    %7 = arith.truncf %6 : vector<16x32xf32> to vector<16x32xbf16>
    %c0_5 = arith.constant 0 : index
    %c0_6 = arith.constant 0 : index
    %8 = vector.load %arg10[%c0_5, %c0_6] : memref<16x32xbf16, #tpu.memory_space<vmem>>, vector<16x32xbf16>
    tpu.vector_store %arg10[%c0_5, %c0_6], %7 {strides = array<i32>} : memref<16x32xbf16, #tpu.memory_space<vmem>>, vector<16x32xbf16>,
    %c0_7 = arith.constant 0 : index
    %c0_8 = arith.constant 0 : index
    %9 = vector.load %arg2[%c0_7, %c0_8] : memref<16x32xf32, #tpu.memory_space<vmem>>, vector<16x32xf32>
    %10 = arith.truncf %9 : vector<16x32xf32> to vector<16x32xbf16>
    %c0_9 = arith.constant 0 : index
    %c0_10 = arith.constant 0 : index
    %11 = vector.load %arg5[%c0_9, %c0_10] : memref<32x32xbf16, #tpu.memory_space<vmem>>, vector<32x32xbf16>
    %cst_11 = arith.constant dense<0.000000e+00> : vector<16x32xf32>
    %12 = tpu.matmul %10, %11, %cst_11 {dimension_numbers = #tpu.dot_dimension_numbers<[1], [0], [0], [1], [0, 0, 1, 1], [], []>} : vector<16x32xbf16>, vector<32x32xbf16>, vector<16x32xf32> -> vector<16x32xf32>
    %c0_12 = arith.constant 0 : index
    %c0_13 = arith.constant 0 : index
    %13 = vector.load %arg8[%c0_12, %c0_13] : memref<1x32xf32, #tpu.memory_space<vmem>>, vector<1x32xf32>
    %14 = vector.broadcast %13 : vector<1x32xf32> to vector<16x32xf32>
    %15 = arith.addf %12, %14 : vector<16x32xf32>
    %16 = arith.truncf %15 : vector<16x32xf32> to vector<16x32xbf16>
    %c0_14 = arith.constant 0 : index
    %c0_15 = arith.constant 0 : index
    %17 = vector.load %arg11[%c0_14, %c0_15] : memref<16x32xbf16, #tpu.memory_space<vmem>>, vector<16x32xbf16>
    tpu.vector_store %arg11[%c0_14, %c0_15], %16 {strides = array<i32>} : memref<16x32xbf16, #tpu.memory_space<vmem>>, vector<16x32xbf16>,
    %c0_16 = arith.constant 0 : index
    %c0_17 = arith.constant 0 : index
    %18 = vector.load %arg3[%c0_16, %c0_17] : memref<16x32xf32, #tpu.memory_space<vmem>>, vector<16x32xf32>
    %19 = arith.truncf %18 : vector<16x32xf32> to vector<16x32xbf16>
    %c0_18 = arith.constant 0 : index
    %c0_19 = arith.constant 0 : index
    %20 = vector.load %arg6[%c0_18, %c0_19] : memref<32x32xbf16, #tpu.memory_space<vmem>>, vector<32x32xbf16>
    %cst_20 = arith.constant dense<0.000000e+00> : vector<16x32xf32>
    %21 = tpu.matmul %19, %20, %cst_20 {dimension_numbers = #tpu.dot_dimension_numbers<[1], [0], [0], [1], [0, 0, 1, 1], [], []>} : vector<16x32xbf16>, vector<32x32xbf16>, vector<16x32xf32> -> vector<16x32xf32>
    %c0_21 = arith.constant 0 : index
    %c0_22 = arith.constant 0 : index
    %22 = vector.load %arg9[%c0_21, %c0_22] : memref<1x32xf32, #tpu.memory_space<vmem>>, vector<1x32xf32>
    %23 = vector.broadcast %22 : vector<1x32xf32> to vector<16x32xf32>
    %24 = arith.addf %21, %23 : vector<16x32xf32>
    %25 = arith.truncf %24 : vector<16x32xf32> to vector<16x32xbf16>
    %c0_23 = arith.constant 0 : index
    %c0_24 = arith.constant 0 : index
    %26 = vector.load %arg12[%c0_23, %c0_24] : memref<16x32xbf16, #tpu.memory_space<vmem>>, vector<16x32xbf16>
    tpu.vector_store %arg12[%c0_23, %c0_24], %25 {strides = array<i32>} : memref<16x32xbf16, #tpu.memory_space<vmem>>, vector<16x32xbf16>,
    return
  }
  func.func @transform_0(%arg0: i32) -> (i32, i32) {
    %c0_i32 = arith.constant 0 : i32
    %c0_i32_0 = arith.constant 0 : i32
    return %arg0, %c0_i32 : i32, i32
  }
  func.func @transform_1(%arg0: i32) -> (i32, i32) {
    %c0_i32 = arith.constant 0 : i32
    %c0_i32_0 = arith.constant 0 : i32
    return %arg0, %c0_i32 : i32, i32
  }
  func.func @transform_2(%arg0: i32) -> (i32, i32) {
    %c0_i32 = arith.constant 0 : i32
    %c0_i32_0 = arith.constant 0 : i32
    return %arg0, %c0_i32 : i32, i32
  }
  func.func @transform_3(%arg0: i32) -> (i32, i32) {
    %c0_i32 = arith.constant 0 : i32
    %c0_i32_0 = arith.constant 0 : i32
    %c0_i32_1 = arith.constant 0 : i32
    return %c0_i32, %c0_i32_0 : i32, i32
  }
  func.func @transform_4(%arg0: i32) -> (i32, i32) {
    %c0_i32 = arith.constant 0 : i32
    %c0_i32_0 = arith.constant 0 : i32
    %c0_i32_1 = arith.constant 0 : i32
    return %c0_i32, %c0_i32_0 : i32, i32
  }
  func.func @transform_5(%arg0: i32) -> (i32, i32) {
    %c0_i32 = arith.constant 0 : i32
    %c0_i32_0 = arith.constant 0 : i32
    %c0_i32_1 = arith.constant 0 : i32
    return %c0_i32, %c0_i32_0 : i32, i32
  }
  func.func @transform_6(%arg0: i32) -> (i32, i32) {
    %c0_i32 = arith.constant 0 : i32
    %c0_i32_0 = arith.constant 0 : i32
    %c0_i32_1 = arith.constant 0 : i32
    return %c0_i32, %c0_i32_0 : i32, i32
  }
  func.func @transform_7(%arg0: i32) -> (i32, i32) {
    %c0_i32 = arith.constant 0 : i32
    %c0_i32_0 = arith.constant 0 : i32
    %c0_i32_1 = arith.constant 0 : i32
    return %c0_i32, %c0_i32_0 : i32, i32
  }
  func.func @transform_8(%arg0: i32) -> (i32, i32) {
    %c0_i32 = arith.constant 0 : i32
    %c0_i32_0 = arith.constant 0 : i32
    %c0_i32_1 = arith.constant 0 : i32
    return %c0_i32, %c0_i32_0 : i32, i32
  }
  func.func @transform_9(%arg0: i32) -> (i32, i32) {
    %c0_i32 = arith.constant 0 : i32
    %c0_i32_0 = arith.constant 0 : i32
    return %arg0, %c0_i32 : i32, i32
  }
  func.func @transform_10(%arg0: i32) -> (i32, i32) {
    %c0_i32 = arith.constant 0 : i32
    %c0_i32_0 = arith.constant 0 : i32
    return %arg0, %c0_i32 : i32, i32
  }
  func.func @transform_11(%arg0: i32) -> (i32, i32) {
    %c0_i32 = arith.constant 0 : i32
    %c0_i32_0 = arith.constant 0 : i32
    return %arg0, %c0_i32 : i32, i32
  }
}

module attributes {stable_mosaic.version = 11 : i64} {
  func.func @_attention_kernel(%arg0: i32, %arg1: i32, %arg2: memref<1x8x32xbf16, #tpu.memory_space<vmem>>, %arg3: memref<1x8x32xbf16, #tpu.memory_space<vmem>>, %arg4: memref<1x8x32xbf16, #tpu.memory_space<vmem>>, %arg5: memref<1x8x8xi8, #tpu.memory_space<vmem>>, %arg6: memref<1x8x32xbf16, #tpu.memory_space<vmem>>, %arg7: memref<4x1x8x8xf32, #tpu.memory_space<vmem>>) attributes {dimension_semantics = [#tpu.dimension_semantics<parallel>, #tpu.dimension_semantics<parallel>], iteration_bounds = array<i64: 2, 1>, scalar_prefetch = 0 : i64, scratch_operands = 0 : i64, tpu.core_type = #tpu.core_type<tc>, window_params = [{transform_indices = @transform_0, window_bounds = array<i64: 1, 8, 32>}, {transform_indices = @transform_1, window_bounds = array<i64: 1, 8, 32>}, {transform_indices = @transform_2, window_bounds = array<i64: 1, 8, 32>}, {transform_indices = @transform_3, window_bounds = array<i64: 1, 8, 8>}, {transform_indices = @transform_4, window_bounds = array<i64: 1, 8, 32>}, {transform_indices = @transform_5, window_bounds = array<i64: 4, 1, 8, 8>}]} {
    %c0 = arith.constant 0 : index
    %c0_0 = arith.constant 0 : index
    %c0_1 = arith.constant 0 : index
    %0 = vector.load %arg5[%c0, %c0_0, %c0_1] : memref<1x8x8xi8, #tpu.memory_space<vmem>>, vector<1x8x8xi8>
    %1 = vector.shape_cast %0 : vector<1x8x8xi8> to vector<8x8xi8>
    %c0_i8 = arith.constant 0 : i8
    %2 = vector.broadcast %c0_i8 : i8 to vector<8x8xi8>
    %3 = arith.cmpi ne, %1, %2 : vector<8x8xi8>
    %c0_2 = arith.constant 0 : index
    %c0_3 = arith.constant 0 : index
    %c0_4 = arith.constant 0 : index
    %4 = vector.load %arg2[%c0_2, %c0_3, %c0_4] : memref<1x8x32xbf16, #tpu.memory_space<vmem>>, vector<1x8x8xbf16>
    %5 = vector.shape_cast %4 : vector<1x8x8xbf16> to vector<8x8xbf16>
    %cst = arith.constant 3.535160e-01 : bf16
    %6 = vector.broadcast %cst : bf16 to vector<8x8xbf16>
    %7 = arith.mulf %5, %6 : vector<8x8xbf16>
    %c0_5 = arith.constant 0 : index
    %c0_6 = arith.constant 0 : index
    %c0_7 = arith.constant 0 : index
    %8 = vector.load %arg3[%c0_5, %c0_6, %c0_7] : memref<1x8x32xbf16, #tpu.memory_space<vmem>>, vector<1x8x8xbf16>
    %9 = vector.shape_cast %8 : vector<1x8x8xbf16> to vector<8x8xbf16>
    %c0_8 = arith.constant 0 : index
    %c0_9 = arith.constant 0 : index
    %c0_10 = arith.constant 0 : index
    %10 = vector.load %arg4[%c0_8, %c0_9, %c0_10] : memref<1x8x32xbf16, #tpu.memory_space<vmem>>, vector<1x8x8xbf16>
    %11 = vector.shape_cast %10 : vector<1x8x8xbf16> to vector<8x8xbf16>
    %cst_11 = arith.constant dense<0.000000e+00> : vector<8x8xf32>
    %12 = tpu.matmul %7, %9, %cst_11 {dimension_numbers = #tpu.dot_dimension_numbers<[1], [1], [0], [0], [0, 0, 1, 0], [], []>} : vector<8x8xbf16>, vector<8x8xbf16>, vector<8x8xf32> -> vector<8x8xf32>
    %cst_12 = arith.constant -1.000000e+30 : f32
    %13 = vector.broadcast %cst_12 : f32 to vector<8x8xf32>
    %14 = arith.select %3, %13, %12 : vector<8x8xi1>, vector<8x8xf32>
    %cst_13 = arith.constant dense<0xFF800000> : vector<8xf32>
    %15 = vector.multi_reduction <maximumf>, %14, %cst_13 [1] : vector<8x8xf32> to vector<8xf32>
    %16 = vector.shape_cast %15 : vector<8xf32> to vector<8x1xf32>
    %17 = vector.broadcast %16 : vector<8x1xf32> to vector<8x8xf32>
    %18 = arith.subf %14, %17 : vector<8x8xf32>
    %19 = math.exp %18 : vector<8x8xf32>
    %cst_14 = arith.constant dense<0.000000e+00> : vector<8xf32>
    %20 = vector.multi_reduction <add>, %19, %cst_14 [1] : vector<8x8xf32> to vector<8xf32>
    %21 = vector.shape_cast %20 : vector<8xf32> to vector<8x1xf32>
    %22 = tpu.reciprocal %21 {approx = true} : vector<8x1xf32> -> vector<8x1xf32>
    %23 = vector.broadcast %22 : vector<8x1xf32> to vector<8x8xf32>
    %24 = arith.mulf %19, %23 : vector<8x8xf32>
    %c0_15 = arith.constant 0 : index
    %c0_16 = arith.constant 0 : index
    %c0_17 = arith.constant 0 : index
    %c0_18 = arith.constant 0 : index
    %25 = vector.load %arg7[%c0_15, %c0_16, %c0_17, %c0_18] : memref<4x1x8x8xf32, #tpu.memory_space<vmem>>, vector<1x1x8x8xf32>
    %26 = vector.shape_cast %25 : vector<1x1x8x8xf32> to vector<8x8xf32>
    %27 = vector.shape_cast %24 : vector<8x8xf32> to vector<1x1x8x8xf32>
    tpu.vector_store %arg7[%c0_15, %c0_16, %c0_17, %c0_18], %27 {strides = array<i32>} : memref<4x1x8x8xf32, #tpu.memory_space<vmem>>, vector<1x1x8x8xf32>,
    %28 = arith.truncf %24 : vector<8x8xf32> to vector<8x8xbf16>
    %cst_19 = arith.constant dense<0.000000e+00> : vector<8x8xf32>
    %29 = tpu.matmul %28, %11, %cst_19 {dimension_numbers = #tpu.dot_dimension_numbers<[1], [0], [0], [1], [0, 0, 1, 1], [], []>} : vector<8x8xbf16>, vector<8x8xbf16>, vector<8x8xf32> -> vector<8x8xf32>
    %30 = arith.truncf %29 : vector<8x8xf32> to vector<8x8xbf16>
    %c0_20 = arith.constant 0 : index
    %c0_21 = arith.constant 0 : index
    %c0_22 = arith.constant 0 : index
    %31 = vector.load %arg6[%c0_20, %c0_21, %c0_22] : memref<1x8x32xbf16, #tpu.memory_space<vmem>>, vector<1x8x8xbf16>
    %32 = vector.shape_cast %31 : vector<1x8x8xbf16> to vector<8x8xbf16>
    %33 = vector.shape_cast %30 : vector<8x8xbf16> to vector<1x8x8xbf16>
    tpu.vector_store %arg6[%c0_20, %c0_21, %c0_22], %33 {strides = array<i32>} : memref<1x8x32xbf16, #tpu.memory_space<vmem>>, vector<1x8x8xbf16>,
    %c0_23 = arith.constant 0 : index
    %c0_24 = arith.constant 0 : index
    %c8 = arith.constant 8 : index
    %34 = vector.load %arg2[%c0_23, %c0_24, %c8] : memref<1x8x32xbf16, #tpu.memory_space<vmem>>, vector<1x8x8xbf16>
    %35 = vector.shape_cast %34 : vector<1x8x8xbf16> to vector<8x8xbf16>
    %cst_25 = arith.constant 3.535160e-01 : bf16
    %36 = vector.broadcast %cst_25 : bf16 to vector<8x8xbf16>
    %37 = arith.mulf %35, %36 : vector<8x8xbf16>
    %c0_26 = arith.constant 0 : index
    %c0_27 = arith.constant 0 : index
    %c8_28 = arith.constant 8 : index
    %38 = vector.load %arg3[%c0_26, %c0_27, %c8_28] : memref<1x8x32xbf16, #tpu.memory_space<vmem>>, vector<1x8x8xbf16>
    %39 = vector.shape_cast %38 : vector<1x8x8xbf16> to vector<8x8xbf16>
    %c0_29 = arith.constant 0 : index
    %c0_30 = arith.constant 0 : index
    %c8_31 = arith.constant 8 : index
    %40 = vector.load %arg4[%c0_29, %c0_30, %c8_31] : memref<1x8x32xbf16, #tpu.memory_space<vmem>>, vector<1x8x8xbf16>
    %41 = vector.shape_cast %40 : vector<1x8x8xbf16> to vector<8x8xbf16>
    %cst_32 = arith.constant dense<0.000000e+00> : vector<8x8xf32>
    %42 = tpu.matmul %37, %39, %cst_32 {dimension_numbers = #tpu.dot_dimension_numbers<[1], [1], [0], [0], [0, 0, 1, 0], [], []>} : vector<8x8xbf16>, vector<8x8xbf16>, vector<8x8xf32> -> vector<8x8xf32>
    %cst_33 = arith.constant -1.000000e+30 : f32
    %43 = vector.broadcast %cst_33 : f32 to vector<8x8xf32>
    %44 = arith.select %3, %43, %42 : vector<8x8xi1>, vector<8x8xf32>
    %cst_34 = arith.constant dense<0xFF800000> : vector<8xf32>
    %45 = vector.multi_reduction <maximumf>, %44, %cst_34 [1] : vector<8x8xf32> to vector<8xf32>
    %46 = vector.shape_cast %45 : vector<8xf32> to vector<8x1xf32>
    %47 = vector.broadcast %46 : vector<8x1xf32> to vector<8x8xf32>
    %48 = arith.subf %44, %47 : vector<8x8xf32>
    %49 = math.exp %48 : vector<8x8xf32>
    %cst_35 = arith.constant dense<0.000000e+00> : vector<8xf32>
    %50 = vector.multi_reduction <add>, %49, %cst_35 [1] : vector<8x8xf32> to vector<8xf32>
    %51 = vector.shape_cast %50 : vector<8xf32> to vector<8x1xf32>
    %52 = tpu.reciprocal %51 {approx = true} : vector<8x1xf32> -> vector<8x1xf32>
    %53 = vector.broadcast %52 : vector<8x1xf32> to vector<8x8xf32>
    %54 = arith.mulf %49, %53 : vector<8x8xf32>
    %c1 = arith.constant 1 : index
    %c0_36 = arith.constant 0 : index
    %c0_37 = arith.constant 0 : index
    %c0_38 = arith.constant 0 : index
    %55 = vector.load %arg7[%c1, %c0_36, %c0_37, %c0_38] : memref<4x1x8x8xf32, #tpu.memory_space<vmem>>, vector<1x1x8x8xf32>
    %56 = vector.shape_cast %55 : vector<1x1x8x8xf32> to vector<8x8xf32>
    %57 = vector.shape_cast %54 : vector<8x8xf32> to vector<1x1x8x8xf32>
    tpu.vector_store %arg7[%c1, %c0_36, %c0_37, %c0_38], %57 {strides = array<i32>} : memref<4x1x8x8xf32, #tpu.memory_space<vmem>>, vector<1x1x8x8xf32>,
    %58 = arith.truncf %54 : vector<8x8xf32> to vector<8x8xbf16>
    %cst_39 = arith.constant dense<0.000000e+00> : vector<8x8xf32>
    %59 = tpu.matmul %58, %41, %cst_39 {dimension_numbers = #tpu.dot_dimension_numbers<[1], [0], [0], [1], [0, 0, 1, 1], [], []>} : vector<8x8xbf16>, vector<8x8xbf16>, vector<8x8xf32> -> vector<8x8xf32>
    %60 = arith.truncf %59 : vector<8x8xf32> to vector<8x8xbf16>
    %c0_40 = arith.constant 0 : index
    %c0_41 = arith.constant 0 : index
    %c8_42 = arith.constant 8 : index
    %61 = vector.load %arg6[%c0_40, %c0_41, %c8_42] : memref<1x8x32xbf16, #tpu.memory_space<vmem>>, vector<1x8x8xbf16>
    %62 = vector.shape_cast %61 : vector<1x8x8xbf16> to vector<8x8xbf16>
    %63 = vector.shape_cast %60 : vector<8x8xbf16> to vector<1x8x8xbf16>
    tpu.vector_store %arg6[%c0_40, %c0_41, %c8_42], %63 {strides = array<i32>} : memref<1x8x32xbf16, #tpu.memory_space<vmem>>, vector<1x8x8xbf16>,
    %c0_43 = arith.constant 0 : index
    %c0_44 = arith.constant 0 : index
    %c16 = arith.constant 16 : index
    %64 = vector.load %arg2[%c0_43, %c0_44, %c16] : memref<1x8x32xbf16, #tpu.memory_space<vmem>>, vector<1x8x8xbf16>
    %65 = vector.shape_cast %64 : vector<1x8x8xbf16> to vector<8x8xbf16>
    %cst_45 = arith.constant 3.535160e-01 : bf16
    %66 = vector.broadcast %cst_45 : bf16 to vector<8x8xbf16>
    %67 = arith.mulf %65, %66 : vector<8x8xbf16>
    %c0_46 = arith.constant 0 : index
    %c0_47 = arith.constant 0 : index
    %c16_48 = arith.constant 16 : index
    %68 = vector.load %arg3[%c0_46, %c0_47, %c16_48] : memref<1x8x32xbf16, #tpu.memory_space<vmem>>, vector<1x8x8xbf16>
    %69 = vector.shape_cast %68 : vector<1x8x8xbf16> to vector<8x8xbf16>
    %c0_49 = arith.constant 0 : index
    %c0_50 = arith.constant 0 : index
    %c16_51 = arith.constant 16 : index
    %70 = vector.load %arg4[%c0_49, %c0_50, %c16_51] : memref<1x8x32xbf16, #tpu.memory_space<vmem>>, vector<1x8x8xbf16>
    %71 = vector.shape_cast %70 : vector<1x8x8xbf16> to vector<8x8xbf16>
    %cst_52 = arith.constant dense<0.000000e+00> : vector<8x8xf32>
    %72 = tpu.matmul %67, %69, %cst_52 {dimension_numbers = #tpu.dot_dimension_numbers<[1], [1], [0], [0], [0, 0, 1, 0], [], []>} : vector<8x8xbf16>, vector<8x8xbf16>, vector<8x8xf32> -> vector<8x8xf32>
    %cst_53 = arith.constant -1.000000e+30 : f32
    %73 = vector.broadcast %cst_53 : f32 to vector<8x8xf32>
    %74 = arith.select %3, %73, %72 : vector<8x8xi1>, vector<8x8xf32>
    %cst_54 = arith.constant dense<0xFF800000> : vector<8xf32>
    %75 = vector.multi_reduction <maximumf>, %74, %cst_54 [1] : vector<8x8xf32> to vector<8xf32>
    %76 = vector.shape_cast %75 : vector<8xf32> to vector<8x1xf32>
    %77 = vector.broadcast %76 : vector<8x1xf32> to vector<8x8xf32>
    %78 = arith.subf %74, %77 : vector<8x8xf32>
    %79 = math.exp %78 : vector<8x8xf32>
    %cst_55 = arith.constant dense<0.000000e+00> : vector<8xf32>
    %80 = vector.multi_reduction <add>, %79, %cst_55 [1] : vector<8x8xf32> to vector<8xf32>
    %81 = vector.shape_cast %80 : vector<8xf32> to vector<8x1xf32>
    %82 = tpu.reciprocal %81 {approx = true} : vector<8x1xf32> -> vector<8x1xf32>
    %83 = vector.broadcast %82 : vector<8x1xf32> to vector<8x8xf32>
    %84 = arith.mulf %79, %83 : vector<8x8xf32>
    %c2 = arith.constant 2 : index
    %c0_56 = arith.constant 0 : index
    %c0_57 = arith.constant 0 : index
    %c0_58 = arith.constant 0 : index
    %85 = vector.load %arg7[%c2, %c0_56, %c0_57, %c0_58] : memref<4x1x8x8xf32, #tpu.memory_space<vmem>>, vector<1x1x8x8xf32>
    %86 = vector.shape_cast %85 : vector<1x1x8x8xf32> to vector<8x8xf32>
    %87 = vector.shape_cast %84 : vector<8x8xf32> to vector<1x1x8x8xf32>
    tpu.vector_store %arg7[%c2, %c0_56, %c0_57, %c0_58], %87 {strides = array<i32>} : memref<4x1x8x8xf32, #tpu.memory_space<vmem>>, vector<1x1x8x8xf32>,
    %88 = arith.truncf %84 : vector<8x8xf32> to vector<8x8xbf16>
    %cst_59 = arith.constant dense<0.000000e+00> : vector<8x8xf32>
    %89 = tpu.matmul %88, %71, %cst_59 {dimension_numbers = #tpu.dot_dimension_numbers<[1], [0], [0], [1], [0, 0, 1, 1], [], []>} : vector<8x8xbf16>, vector<8x8xbf16>, vector<8x8xf32> -> vector<8x8xf32>
    %90 = arith.truncf %89 : vector<8x8xf32> to vector<8x8xbf16>
    %c0_60 = arith.constant 0 : index
    %c0_61 = arith.constant 0 : index
    %c16_62 = arith.constant 16 : index
    %91 = vector.load %arg6[%c0_60, %c0_61, %c16_62] : memref<1x8x32xbf16, #tpu.memory_space<vmem>>, vector<1x8x8xbf16>
    %92 = vector.shape_cast %91 : vector<1x8x8xbf16> to vector<8x8xbf16>
    %93 = vector.shape_cast %90 : vector<8x8xbf16> to vector<1x8x8xbf16>
    tpu.vector_store %arg6[%c0_60, %c0_61, %c16_62], %93 {strides = array<i32>} : memref<1x8x32xbf16, #tpu.memory_space<vmem>>, vector<1x8x8xbf16>,
    %c0_63 = arith.constant 0 : index
    %c0_64 = arith.constant 0 : index
    %c24 = arith.constant 24 : index
    %94 = vector.load %arg2[%c0_63, %c0_64, %c24] : memref<1x8x32xbf16, #tpu.memory_space<vmem>>, vector<1x8x8xbf16>
    %95 = vector.shape_cast %94 : vector<1x8x8xbf16> to vector<8x8xbf16>
    %cst_65 = arith.constant 3.535160e-01 : bf16
    %96 = vector.broadcast %cst_65 : bf16 to vector<8x8xbf16>
    %97 = arith.mulf %95, %96 : vector<8x8xbf16>
    %c0_66 = arith.constant 0 : index
    %c0_67 = arith.constant 0 : index
    %c24_68 = arith.constant 24 : index
    %98 = vector.load %arg3[%c0_66, %c0_67, %c24_68] : memref<1x8x32xbf16, #tpu.memory_space<vmem>>, vector<1x8x8xbf16>
    %99 = vector.shape_cast %98 : vector<1x8x8xbf16> to vector<8x8xbf16>
    %c0_69 = arith.constant 0 : index
    %c0_70 = arith.constant 0 : index
    %c24_71 = arith.constant 24 : index
    %100 = vector.load %arg4[%c0_69, %c0_70, %c24_71] : memref<1x8x32xbf16, #tpu.memory_space<vmem>>, vector<1x8x8xbf16>
    %101 = vector.shape_cast %100 : vector<1x8x8xbf16> to vector<8x8xbf16>
    %cst_72 = arith.constant dense<0.000000e+00> : vector<8x8xf32>
    %102 = tpu.matmul %97, %99, %cst_72 {dimension_numbers = #tpu.dot_dimension_numbers<[1], [1], [0], [0], [0, 0, 1, 0], [], []>} : vector<8x8xbf16>, vector<8x8xbf16>, vector<8x8xf32> -> vector<8x8xf32>
    %cst_73 = arith.constant -1.000000e+30 : f32
    %103 = vector.broadcast %cst_73 : f32 to vector<8x8xf32>
    %104 = arith.select %3, %103, %102 : vector<8x8xi1>, vector<8x8xf32>
    %cst_74 = arith.constant dense<0xFF800000> : vector<8xf32>
    %105 = vector.multi_reduction <maximumf>, %104, %cst_74 [1] : vector<8x8xf32> to vector<8xf32>
    %106 = vector.shape_cast %105 : vector<8xf32> to vector<8x1xf32>
    %107 = vector.broadcast %106 : vector<8x1xf32> to vector<8x8xf32>
    %108 = arith.subf %104, %107 : vector<8x8xf32>
    %109 = math.exp %108 : vector<8x8xf32>
    %cst_75 = arith.constant dense<0.000000e+00> : vector<8xf32>
    %110 = vector.multi_reduction <add>, %109, %cst_75 [1] : vector<8x8xf32> to vector<8xf32>
    %111 = vector.shape_cast %110 : vector<8xf32> to vector<8x1xf32>
    %112 = tpu.reciprocal %111 {approx = true} : vector<8x1xf32> -> vector<8x1xf32>
    %113 = vector.broadcast %112 : vector<8x1xf32> to vector<8x8xf32>
    %114 = arith.mulf %109, %113 : vector<8x8xf32>
    %c3 = arith.constant 3 : index
    %c0_76 = arith.constant 0 : index
    %c0_77 = arith.constant 0 : index
    %c0_78 = arith.constant 0 : index
    %115 = vector.load %arg7[%c3, %c0_76, %c0_77, %c0_78] : memref<4x1x8x8xf32, #tpu.memory_space<vmem>>, vector<1x1x8x8xf32>
    %116 = vector.shape_cast %115 : vector<1x1x8x8xf32> to vector<8x8xf32>
    %117 = vector.shape_cast %114 : vector<8x8xf32> to vector<1x1x8x8xf32>
    tpu.vector_store %arg7[%c3, %c0_76, %c0_77, %c0_78], %117 {strides = array<i32>} : memref<4x1x8x8xf32, #tpu.memory_space<vmem>>, vector<1x1x8x8xf32>,
    %118 = arith.truncf %114 : vector<8x8xf32> to vector<8x8xbf16>
    %cst_79 = arith.constant dense<0.000000e+00> : vector<8x8xf32>
    %119 = tpu.matmul %118, %101, %cst_79 {dimension_numbers = #tpu.dot_dimension_numbers<[1], [0], [0], [1], [0, 0, 1, 1], [], []>} : vector<8x8xbf16>, vector<8x8xbf16>, vector<8x8xf32> -> vector<8x8xf32>
    %120 = arith.truncf %119 : vector<8x8xf32> to vector<8x8xbf16>
    %c0_80 = arith.constant 0 : index
    %c0_81 = arith.constant 0 : index
    %c24_82 = arith.constant 24 : index
    %121 = vector.load %arg6[%c0_80, %c0_81, %c24_82] : memref<1x8x32xbf16, #tpu.memory_space<vmem>>, vector<1x8x8xbf16>
    %122 = vector.shape_cast %121 : vector<1x8x8xbf16> to vector<8x8xbf16>
    %123 = vector.shape_cast %120 : vector<8x8xbf16> to vector<1x8x8xbf16>
    tpu.vector_store %arg6[%c0_80, %c0_81, %c24_82], %123 {strides = array<i32>} : memref<1x8x32xbf16, #tpu.memory_space<vmem>>, vector<1x8x8xbf16>,
    return
  }
  func.func @transform_0(%arg0: i32, %arg1: i32) -> (i32, i32, i32) {
    %c0_i32 = arith.constant 0 : i32
    %c0_i32_0 = arith.constant 0 : i32
    return %arg0, %arg1, %c0_i32 : i32, i32, i32
  }
  func.func @transform_1(%arg0: i32, %arg1: i32) -> (i32, i32, i32) {
    %c0_i32 = arith.constant 0 : i32
    %c0_i32_0 = arith.constant 0 : i32
    %c0_i32_1 = arith.constant 0 : i32
    return %arg0, %c0_i32, %c0_i32_0 : i32, i32, i32
  }
  func.func @transform_2(%arg0: i32, %arg1: i32) -> (i32, i32, i32) {
    %c0_i32 = arith.constant 0 : i32
    %c0_i32_0 = arith.constant 0 : i32
    %c0_i32_1 = arith.constant 0 : i32
    return %arg0, %c0_i32, %c0_i32_0 : i32, i32, i32
  }
  func.func @transform_3(%arg0: i32, %arg1: i32) -> (i32, i32, i32) {
    %c0_i32 = arith.constant 0 : i32
    %c0_i32_0 = arith.constant 0 : i32
    return %arg0, %arg1, %c0_i32 : i32, i32, i32
  }
  func.func @transform_4(%arg0: i32, %arg1: i32) -> (i32, i32, i32) {
    %c0_i32 = arith.constant 0 : i32
    %c0_i32_0 = arith.constant 0 : i32
    return %arg0, %arg1, %c0_i32 : i32, i32, i32
  }
  func.func @transform_5(%arg0: i32, %arg1: i32) -> (i32, i32, i32, i32) {
    %c0_i32 = arith.constant 0 : i32
    %c0_i32_0 = arith.constant 0 : i32
    %c0_i32_1 = arith.constant 0 : i32
    return %c0_i32, %arg0, %arg1, %c0_i32_0 : i32, i32, i32, i32
  }
}

</mosaic_0001>

<llo_original>
// kernel: multi_head_attention.5
$region0: #{multi_head_attention.5}
  #allocation0 [shape = 'u32[]', space=smem, size = 0x4, offset = 0x4, fixed_abs, tag = 'smem constant byte address 0x4 - core index']
  #allocation1 [shape = 'u32[144,128]{1,0:T(1,128)}', space=vmem, size = 0x12000, scoped, tag = 'internal scratch']
  %s0 = inlined_call_operand.vmem [shape: bf16[16,32], index: 0, kind: input, shape index: {}]
  %s1 = inlined_call_operand.vmem [shape: bf16[32,32], index: 1, kind: input, shape index: {}]
  %s2 = inlined_call_operand.vmem [shape: f32[1,32], index: 2, kind: input, shape index: {}]
  %s3 = inlined_call_operand.vmem [shape: f32[16,32], index: 3, kind: input, shape index: {}]
  %s4 = inlined_call_operand.vmem [shape: f32[1,32], index: 4, kind: input, shape index: {}]
  %s5 = inlined_call_operand.vmem [shape: f32[1,32], index: 5, kind: input, shape index: {}]
  %s6 = inlined_call_operand.hbm [shape: f32[16,32], index: 6, kind: output, shape index: {}]
  %s7 = sld [smem:[#allocation0]]
  $region34: #{multi_head_attention.5} parent=0
    _
  %s9 = ssub.s32 1, %s7
  %s10 = scalar_select 0, %s9, %s7
  $region1: #{multi_head_attention.5} parent=0
    #allocation2 [shape = 'u8[8192]{0}', space=vmem, size = 0x2000, scoped, tag = 'output window, operand 0, single buffered']
    #allocation3 [shape = 's32[1]{0}', space=sflag, size = 0x4, scoped, tag = 'scoped memory for multi_head_attention.5']
    %11 = vsyncpa [#allocation3], 0
    // Predicated region
    $region2: #{multi_head_attention.5} parent=1 // pred_check
      _
    $region3: #{multi_head_attention.5} parent=1 // pred_check_branch
      %13 = sbr.rel (0) target = $region5
    $region4: #{multi_head_attention.5} parent=1 // pred_region
      _
    $region5: #{multi_head_attention.5} parent=1 // pred_fallthru
      _
    // Predicated region
    $region6: #{multi_head_attention.5} parent=1 // pred_check
      _
    $region7: #{multi_head_attention.5} parent=1 // pred_check_branch
      %15 = sbr.rel (0) target = $region9
    $region8: #{multi_head_attention.5} parent=1 // pred_region
      _
    $region9: #{multi_head_attention.5} parent=1 // pred_fallthru
      _
    // Predicated region
    $region10: #{multi_head_attention.5} parent=1 // pred_check
      _
    $region11: #{multi_head_attention.5} parent=1 // pred_check_branch
      %17 = sbr.rel (0) target = $region13
    $region12: #{multi_head_attention.5} parent=1 // pred_region
      _
    $region13: #{multi_head_attention.5} parent=1 // pred_fallthru
      _
    // Predicated region
    $region14: #{multi_head_attention.5} parent=1 // pred_check
      _
    $region15: #{multi_head_attention.5} parent=1 // pred_check_branch
      %19 = sbr.rel (0) target = $region17
    $region16: #{multi_head_attention.5} parent=1 // pred_region
      _
    $region17: #{multi_head_attention.5} parent=1 // pred_fallthru
      _
    // Predicated region
    $region18: #{multi_head_attention.5} parent=1 // pred_check
      _
    $region19: #{multi_head_attention.5} parent=1 // pred_check_branch
      %21 = sbr.rel (0) target = $region21
    $region20: #{multi_head_attention.5} parent=1 // pred_region
      _
    $region21: #{multi_head_attention.5} parent=1 // pred_fallthru
      _
    // Predicated region
    $region22: #{multi_head_attention.5} parent=1 // pred_check
      _
    $region23: #{multi_head_attention.5} parent=1 // pred_check_branch
      %23 = sbr.rel (0) target = $region25
    $region24: #{multi_head_attention.5} parent=1 // pred_region
      _
    $region25: #{multi_head_attention.5} parent=1 // pred_fallthru
      _
    %v25 = vld [vmem:[%s0] sm:$0xf]
    %v26 = vld [vmem:[%s0 + $0x4] sm:$0xf]
    %v27 = vld [vmem:[%s1] sm:$0xf]
    %v28 = vld [vmem:[%s1 + $0x4] sm:$0xf]
    %v29 = vld [vmem:[%s1 + $0x8] sm:$0xf]
    %v30 = vld [vmem:[%s1 + $0xc] sm:$0xf]
    %v31 = vld [vmem:[%s2] sm:$0x1]
    %v33 = vlaneseq
    %v34 = vshrl.u32 %v33, 7
    %v35 = vsub.s32 0, %v34
    %v36 = vrot.slane %v31, %v35
    %v40 = vunpack.c.l.b16 %v25
    %v41 = vunpack.c.l.b16 %v26
    %v42 = vpack.c.b16 %v41, %v40
    %v47 = vunpack.c.l.b16 %v27
    %v48 = vunpack.c.l.b16 %v28
    %v49 = vunpack.c.l.b16 %v29
    %v50 = vunpack.c.l.b16 %v30
    %v51 = vpack.c.b16 %v48, %v47
    %v52 = vpack.c.b16 %v50, %v49
    %vm55 = vcmask 261120
    %v57 = vsel %vm55, %v42, 0
    %59 = vmatprep.subr.bf16.mxu0 0
    %60 = vmatpush1.bf16.msra.mxu0 %v51
    %61 = vmatprep.subr.bf16.mxu0 0
    %62 = vmatpush1.bf16.msra.mxu0 %v52
    %63 = vmatprep.subr.bf16.mxu0 0
    %64 = vmatpush1.bf16.msra.mxu0 0
    %65 = vmatprep.subr.bf16.mxu0 0
    %66 = vmatpush1.bf16.msra.mxu0 0
    %67 = vmatprep.subr.bf16.mxu0 0
    %68 = vmatpush1.bf16.msra.mxu0 0
    %69 = vmatprep.subr.bf16.mxu0 0
    %70 = vmatpush1.bf16.msra.mxu0 0
    %71 = vmatprep.subr.bf16.mxu0 0
    %72 = vmatpush1.bf16.msra.mxu0 0
    %73 = vmatprep.subr.bf16.mxu0 0
    %74 = vmatpush1.bf16.msra.mxu0 0
    %75 = vmatprep.subr.bf16.mxu0 0
    %76 = vmatpush1.bf16.msra.mxu0 0
    %77 = vmatprep.subr.bf16.mxu0 0
    %78 = vmatpush1.bf16.msra.mxu0 0
    %79 = vmatprep.subr.bf16.mxu0 0
    %80 = vmatpush1.bf16.msra.mxu0 0
    %81 = vmatprep.subr.bf16.mxu0 0
    %82 = vmatpush1.bf16.msra.mxu0 0
    %83 = vmatprep.subr.bf16.mxu0 0
    %84 = vmatpush1.bf16.msra.mxu0 0
    %85 = vmatprep.subr.bf16.mxu0 0
    %86 = vmatpush1.bf16.msra.mxu0 0
    %87 = vmatprep.subr.bf16.mxu0 0
    %88 = vmatpush1.bf16.msra.mxu0 0
    %89 = vmatprep.subr.bf16.mxu0 0
    %90 = vmatpush1.bf16.msra.mxu0 0
    %91 = vmatprep.mubr.bf16.mxu0 0
    %92 = vmatmul.mubr.bf16.gmra.mrb[0].mxu0 %v57
    %v93 = vpop.f32.mrb[0].mxu0
    %v94 = vadd.f32 %v36, %v93
    %v95 = vpop.f32.mrb[0].mxu0
    %v96 = vpop.f32.mrb[0].mxu0
    %v97 = vadd.f32 %v36, %v96
    %v98 = vpop.f32.mrb[0].mxu0
    %99 = vdwg.mxu0
    %v100 = vld [vmem:[%s3] sm:$0xff]
    %v101 = vld [vmem:[%s3 + $0x8] sm:$0xff]
    %v102 = vadd.f32 %v94, %v100
    %v103 = vadd.f32 %v97, %v101
    %v104 = vsel %vm55, %v102, 0.0
    %105 = vadd.xlane.f32.xlu0 %v104
    %v106 = vpop.xlane.xlu0 %105
    %v107 = vsel %vm55, %v103, 0.0
    %108 = vadd.xlane.f32.xlu0 %v107
    %v109 = vpop.xlane.xlu0 %108
    %v110 = vrcp.pop 32.0
    %v111 = vmul.f32 %v106, %v110
    %v112 = vmul.f32 %v109, %v110
    %v113 = vsub.f32 %v102, %v111
    %v114 = vsub.f32 %v103, %v112
    %v115 = vmul.f32 %v113, %v113
    %v116 = vmul.f32 %v114, %v114
    %v117 = vsel %vm55, %v115, 0.0
    %118 = vadd.xlane.f32.xlu0 %v117
    %v119 = vpop.xlane.xlu0 %118
    %v120 = vsel %vm55, %v116, 0.0
    %121 = vadd.xlane.f32.xlu0 %v120
    %v122 = vpop.xlane.xlu0 %121
    %v123 = vmul.f32 %v119, %v110
    %v124 = vmul.f32 %v122, %v110
    %v125 = vadd.f32 %v123, 1e-05
    %v126 = vadd.f32 %v124, 1e-05
    %v127 = vrsqrt.pop %v125
    %v128 = vrsqrt.pop %v126
    %v129 = vmul.f32 %v113, %v127
    %v130 = vmul.f32 %v114, %v128
    %v131 = vld [vmem:[%s4] sm:$0x1]
    %v133 = vlaneseq
    %v134 = vshrl.u32 %v133, 7
    %v135 = vsub.s32 0, %v134
    %v136 = vrot.slane %v131, %v135
    %v138 = vmul.f32 %v129, %v136
    %v139 = vmul.f32 %v130, %v136
    %v140 = vld [vmem:[%s5] sm:$0x1]
    %v142 = vlaneseq
    %v143 = vshrl.u32 %v142, 7
    %v144 = vsub.s32 0, %v143
    %v145 = vrot.slane %v140, %v144
    %v147 = vadd.f32 %v138, %v145
    %v148 = vadd.f32 %v139, %v145
    %149 = vst.msk [vmem:[#allocation2] sm:$0xff] %vm55, %v147
    %150 = vst.msk [vmem:[#allocation2 + $0x8] sm:$0xff] %vm55, %v148
    // Predicated region
    $region26: #{multi_head_attention.5} parent=1 // pred_check
      _
    $region27: #{multi_head_attention.5} parent=1 // pred_check_branch
      %152 = sbr.rel (0) target = $region29
    $region28: #{multi_head_attention.5} parent=1 // pred_region
      %s154 = ssub.s32 256, 256
      %155 = vsyncadd [#allocation3], %s154
      %s156 = sshll.u32 [#allocation2], 4
      %s157 = int_to_ptr.vmem [resolvable:$true] %s156
      %162 = dma.vmem_to_hbm [thread:$0]  %s157, 256, %s6, [#allocation3], 128, 128, 8
    $region29: #{multi_head_attention.5} parent=1 // pred_fallthru
      _
    // Predicated region
    $region30: #{multi_head_attention.5} parent=1 // pred_check
      _
    $region31: #{multi_head_attention.5} parent=1 // pred_check_branch
      %164 = sbr.rel (0) target = $region33
    $region32: #{multi_head_attention.5} parent=1 // pred_region
      %165 = dma.done [#allocation3], 256
    $region33: #{multi_head_attention.5} parent=1 // pred_fallthru
      _
    %166 = vsyncpa [#allocation3], 1

// kernel: multi_head_attention.3
$region0: #{multi_head_attention.3}
  #allocation0 [shape = 'u32[]', space=smem, size = 0x4, offset = 0x4, fixed_abs, tag = 'smem constant byte address 0x4 - core index']
  #allocation1 [shape = 'u32[144,128]{1,0:T(1,128)}', space=vmem, size = 0x12000, scoped, tag = 'internal scratch']
  %s0 = inlined_call_operand.vmem [shape: f32[16,32], index: 0, kind: input, shape index: {}]
  %s1 = inlined_call_operand.vmem [shape: f32[16,32], index: 1, kind: input, shape index: {}]
  %s2 = inlined_call_operand.vmem [shape: f32[16,32], index: 2, kind: input, shape index: {}]
  %s3 = inlined_call_operand.vmem [shape: bf16[32,32], index: 3, kind: input, shape index: {}]
  %s4 = inlined_call_operand.hbm [shape: bf16[32,32], index: 4, kind: input, shape index: {}]
  %s5 = inlined_call_operand.hbm [shape: bf16[32,32], index: 5, kind: input, shape index: {}]
  %s6 = inlined_call_operand.hbm [shape: f32[1,32], index: 6, kind: input, shape index: {}]
  %s7 = inlined_call_operand.hbm [shape: f32[1,32], index: 7, kind: input, shape index: {}]
  %s8 = inlined_call_operand.hbm [shape: f32[1,32], index: 8, kind: input, shape index: {}]
  %s9 = inlined_call_operand.vmem [shape: bf16[16,32], index: 9, kind: output, shape index: {0}]
  %s10 = inlined_call_operand.vmem [shape: bf16[16,32], index: 10, kind: output, shape index: {1}]
  %s11 = inlined_call_operand.vmem [shape: bf16[16,32], index: 11, kind: output, shape index: {2}]
  %12 = xla_tuple %s9, %s10, %s11
  %s13 = sld [smem:[#allocation0]]
  $region82: #{multi_head_attention.3} parent=0
    _
  %s15 = ssub.s32 1, %s13
  %s16 = scalar_select 0, %s15, %s13
  $region1: #{multi_head_attention.3} parent=0
    #allocation2 [shape = 'u8[8192]{0}', space=vmem, size = 0x2000, scoped, tag = 'input window, operand 4, single buffered']
    #allocation3 [shape = 's32[1]{0}', space=sflag, size = 0x4, scoped, tag = 'scoped memory for multi_head_attention.3']
    #allocation4 [shape = 'u8[8192]{0}', space=vmem, size = 0x2000, scoped, tag = 'input window, operand 5, single buffered']
    #allocation5 [shape = 's32[1]{0}', space=sflag, size = 0x4, scoped, tag = 'scoped memory for multi_head_attention.3']
    #allocation6 [shape = 'u8[512]{0}', space=vmem, size = 0x400, scoped, tag = 'input window, operand 6, single buffered']
    #allocation7 [shape = 'u8[512]{0}', space=vmem, size = 0x400, scoped, tag = 'input window, operand 7, single buffered']
    #allocation8 [shape = 's32[1]{0}', space=sflag, size = 0x4, scoped, tag = 'scoped memory for multi_head_attention.3']
    #allocation9 [shape = 'u8[512]{0}', space=vmem, size = 0x400, scoped, tag = 'input window, operand 8, single buffered']
    %17 = vsyncpa [#allocation3], 0
    %18 = vsyncpa [#allocation5], 0
    %19 = vsyncpa [#allocation8], 0
    // Predicated region
    $region2: #{multi_head_attention.3} parent=1 // pred_check
      _
    $region3: #{multi_head_attention.3} parent=1 // pred_check_branch
      %21 = sbr.rel (0) target = $region5
    $region4: #{multi_head_attention.3} parent=1 // pred_region
      _
    $region5: #{multi_head_attention.3} parent=1 // pred_fallthru
      _
    // Predicated region
    $region6: #{multi_head_attention.3} parent=1 // pred_check
      _
    $region7: #{multi_head_attention.3} parent=1 // pred_check_branch
      %23 = sbr.rel (0) target = $region9
    $region8: #{multi_head_attention.3} parent=1 // pred_region
      _
    $region9: #{multi_head_attention.3} parent=1 // pred_fallthru
      _
    // Predicated region
    $region10: #{multi_head_attention.3} parent=1 // pred_check
      _
    $region11: #{multi_head_attention.3} parent=1 // pred_check_branch
      %25 = sbr.rel (0) target = $region13
    $region12: #{multi_head_attention.3} parent=1 // pred_region
      _
    $region13: #{multi_head_attention.3} parent=1 // pred_fallthru
      _
    // Predicated region
    $region14: #{multi_head_attention.3} parent=1 // pred_check
      _
    $region15: #{multi_head_attention.3} parent=1 // pred_check_branch
      %27 = sbr.rel (0) target = $region17
    $region16: #{multi_head_attention.3} parent=1 // pred_region
      _
    $region17: #{multi_head_attention.3} parent=1 // pred_fallthru
      _
    // Predicated region
    $region18: #{multi_head_attention.3} parent=1 // pred_check
      _
    $region19: #{multi_head_attention.3} parent=1 // pred_check_branch
      %29 = sbr.rel (0) target = $region21
    $region20: #{multi_head_attention.3} parent=1 // pred_region
      %s31 = ssub.s32 256, 256
      %32 = vsyncadd [#allocation3], %s31
      %s33 = sshll.u32 [#allocation2], 4
      %s34 = int_to_ptr.vmem [resolvable:$true] %s33
      %39 = dma.hbm_to_vmem [thread:$0]  %s4, 256, %s34, [#allocation3], 64, 64, 4
    $region21: #{multi_head_attention.3} parent=1 // pred_fallthru
      _
    // Predicated region
    $region22: #{multi_head_attention.3} parent=1 // pred_check
      _
    $region23: #{multi_head_attention.3} parent=1 // pred_check_branch
      %41 = sbr.rel (0) target = $region25
    $region24: #{multi_head_attention.3} parent=1 // pred_region
      %s43 = ssub.s32 256, 256
      %44 = vsyncadd [#allocation5], %s43
      %s45 = sshll.u32 [#allocation4], 4
      %s46 = int_to_ptr.vmem [resolvable:$true] %s45
      %51 = dma.hbm_to_vmem [thread:$0]  %s5, 256, %s46, [#allocation5], 64, 64, 4
    $region25: #{multi_head_attention.3} parent=1 // pred_fallthru
      _
    // Predicated region
    $region26: #{multi_head_attention.3} parent=1 // pred_check
      _
    $region27: #{multi_head_attention.3} parent=1 // pred_check_branch
      %53 = sbr.rel (0) target = $region29
    $region28: #{multi_head_attention.3} parent=1 // pred_region
      %s55 = ssub.s32 16, 16
      %56 = vsyncadd [#allocation5], %s55
      %s58 = sshll.u32 [#allocation6], 4
      %s59 = int_to_ptr.vmem [resolvable:$true] %s58
      %61 = dma.hbm_to_vmem [thread:$0]  %s6, 16, %s59, [#allocation5]
    $region29: #{multi_head_attention.3} parent=1 // pred_fallthru
      _
    // Predicated region
    $region30: #{multi_head_attention.3} parent=1 // pred_check
      _
    $region31: #{multi_head_attention.3} parent=1 // pred_check_branch
      %63 = sbr.rel (0) target = $region33
    $region32: #{multi_head_attention.3} parent=1 // pred_region
      %s65 = ssub.s32 16, 16
      %66 = vsyncadd [#allocation8], %s65
      %s68 = sshll.u32 [#allocation7], 4
      %s69 = int_to_ptr.vmem [resolvable:$true] %s68
      %71 = dma.hbm_to_vmem [thread:$0]  %s7, 16, %s69, [#allocation8]
    $region33: #{multi_head_attention.3} parent=1 // pred_fallthru
      _
    // Predicated region
    $region34: #{multi_head_attention.3} parent=1 // pred_check
      _
    $region35: #{multi_head_attention.3} parent=1 // pred_check_branch
      %73 = sbr.rel (0) target = $region37
    $region36: #{multi_head_attention.3} parent=1 // pred_region
      %s75 = ssub.s32 16, 16
      %76 = vsyncadd [#allocation8], %s75
      %s78 = sshll.u32 [#allocation9], 4
      %s79 = int_to_ptr.vmem [resolvable:$true] %s78
      %81 = dma.hbm_to_vmem [thread:$0]  %s8, 16, %s79, [#allocation8]
    $region37: #{multi_head_attention.3} parent=1 // pred_fallthru
      _
    // Predicated region
    $region38: #{multi_head_attention.3} parent=1 // pred_check
      _
    $region39: #{multi_head_attention.3} parent=1 // pred_check_branch
      %83 = sbr.rel (0) target = $region41
    $region40: #{multi_head_attention.3} parent=1 // pred_region
      %84 = dma.done [#allocation3], 256
    $region41: #{multi_head_attention.3} parent=1 // pred_fallthru
      _
    // Predicated region
    $region42: #{multi_head_attention.3} parent=1 // pred_check
      _
    $region43: #{multi_head_attention.3} parent=1 // pred_check_branch
      %86 = sbr.rel (0) target = $region45
    $region44: #{multi_head_attention.3} parent=1 // pred_region
      %87 = dma.done [#allocation5], 256
    $region45: #{multi_head_attention.3} parent=1 // pred_fallthru
      _
    // Predicated region
    $region46: #{multi_head_attention.3} parent=1 // pred_check
      _
    $region47: #{multi_head_attention.3} parent=1 // pred_check_branch
      %89 = sbr.rel (0) target = $region49
    $region48: #{multi_head_attention.3} parent=1 // pred_region
      %90 = dma.done [#allocation5], 16
    $region49: #{multi_head_attention.3} parent=1 // pred_fallthru
      _
    // Predicated region
    $region50: #{multi_head_attention.3} parent=1 // pred_check
      _
    $region51: #{multi_head_attention.3} parent=1 // pred_check_branch
      %92 = sbr.rel (0) target = $region53
    $region52: #{multi_head_attention.3} parent=1 // pred_region
      %93 = dma.done [#allocation8], 16
    $region53: #{multi_head_attention.3} parent=1 // pred_fallthru
      _
    // Predicated region
    $region54: #{multi_head_attention.3} parent=1 // pred_check
      _
    $region55: #{multi_head_attention.3} parent=1 // pred_check_branch
      %95 = sbr.rel (0) target = $region57
    $region56: #{multi_head_attention.3} parent=1 // pred_region
      %96 = dma.done [#allocation8], 16
    $region57: #{multi_head_attention.3} parent=1 // pred_fallthru
      _
    %v98 = vld [vmem:[%s0] sm:$0xff]
    %v99 = vld [vmem:[%s0 + $0x8] sm:$0xff]
    %v100 = vpack.c.bf16 %v99, %v98
    %v101 = vld [vmem:[%s3] sm:$0xf]
    %v102 = vld [vmem:[%s3 + $0x4] sm:$0xf]
    %v103 = vld [vmem:[%s3 + $0x8] sm:$0xf]
    %v104 = vld [vmem:[%s3 + $0xc] sm:$0xf]
    %v105 = vld [vmem:[#allocation6] sm:$0x1]
    %v107 = vlaneseq
    %v108 = vshrl.u32 %v107, 7
    %v109 = vsub.s32 0, %v108
    %v110 = vrot.slane %v105, %v109
    %v116 = vunpack.c.l.b16 %v101
    %v117 = vunpack.c.l.b16 %v102
    %v118 = vunpack.c.l.b16 %v103
    %v119 = vunpack.c.l.b16 %v104
    %v120 = vpack.c.b16 %v117, %v116
    %v121 = vpack.c.b16 %v119, %v118
    %vm124 = vcmask 261120
    %v126 = vsel %vm124, %v100, 0
    %128 = vmatprep.subr.bf16.mxu0 0
    %129 = vmatpush1.bf16.msra.mxu0 %v120
    %130 = vmatprep.subr.bf16.mxu0 0
    %131 = vmatpush1.bf16.msra.mxu0 %v121
    %132 = vmatprep.subr.bf16.mxu0 0
    %133 = vmatpush1.bf16.msra.mxu0 0
    %134 = vmatprep.subr.bf16.mxu0 0
    %135 = vmatpush1.bf16.msra.mxu0 0
    %136 = vmatprep.subr.bf16.mxu0 0
    %137 = vmatpush1.bf16.msra.mxu0 0
    %138 = vmatprep.subr.bf16.mxu0 0
    %139 = vmatpush1.bf16.msra.mxu0 0
    %140 = vmatprep.subr.bf16.mxu0 0
    %141 = vmatpush1.bf16.msra.mxu0 0
    %142 = vmatprep.subr.bf16.mxu0 0
    %143 = vmatpush1.bf16.msra.mxu0 0
    %144 = vmatprep.subr.bf16.mxu0 0
    %145 = vmatpush1.bf16.msra.mxu0 0
    %146 = vmatprep.subr.bf16.mxu0 0
    %147 = vmatpush1.bf16.msra.mxu0 0
    %148 = vmatprep.subr.bf16.mxu0 0
    %149 = vmatpush1.bf16.msra.mxu0 0
    %150 = vmatprep.subr.bf16.mxu0 0
    %151 = vmatpush1.bf16.msra.mxu0 0
    %152 = vmatprep.subr.bf16.mxu0 0
    %153 = vmatpush1.bf16.msra.mxu0 0
    %154 = vmatprep.subr.bf16.mxu0 0
    %155 = vmatpush1.bf16.msra.mxu0 0
    %156 = vmatprep.subr.bf16.mxu0 0
    %157 = vmatpush1.bf16.msra.mxu0 0
    %158 = vmatprep.subr.bf16.mxu0 0
    %159 = vmatpush1.bf16.msra.mxu0 0
    %160 = vmatprep.mubr.bf16.mxu0 0
    %161 = vmatmul.mubr.bf16.gmra.mrb[0].mxu0 %v126
    %v162 = vpop.f32.mrb[0].mxu0
    %v163 = vadd.f32 %v110, %v162
    %v164 = vpop.f32.mrb[0].mxu0
    %v165 = vpop.f32.mrb[0].mxu0
    %v166 = vadd.f32 %v110, %v165
    %v167 = vpop.f32.mrb[0].mxu0
    %168 = vdwg.mxu0
    %v169 = vpack.c.bf16 %v166, %v163
    %v171 = vunpack.c.l.b16 %v169
    %v172 = vunpack.c.h.b16 %v169
    %v173 = vpack.c.b16 %v171, %v171
    %v174 = vpack.c.b16 %v172, %v172
    %vm177 = vcmask 257024
    %178 = vst.msk [vmem:[%s9] sm:$0xf] %vm177, %v173
    %179 = vst.msk [vmem:[%s9 + $0x4] sm:$0xf] %vm177, %v174
    %v180 = vld [vmem:[%s1] sm:$0xff]
    %v181 = vld [vmem:[%s1 + $0x8] sm:$0xff]
    %v182 = vpack.c.bf16 %v181, %v180
    %v183 = vld [vmem:[#allocation2] sm:$0xf]
    %v184 = vld [vmem:[#allocation2 + $0x4] sm:$0xf]
    %v185 = vld [vmem:[#allocation2 + $0x8] sm:$0xf]
    %v186 = vld [vmem:[#allocation2 + $0xc] sm:$0xf]
    %v187 = vld [vmem:[#allocation7] sm:$0x1]
    %v189 = vlaneseq
    %v190 = vshrl.u32 %v189, 7
    %v191 = vsub.s32 0, %v190
    %v192 = vrot.slane %v187, %v191
    %v198 = vunpack.c.l.b16 %v183
    %v199 = vunpack.c.l.b16 %v184
    %v200 = vunpack.c.l.b16 %v185
    %v201 = vunpack.c.l.b16 %v186
    %v202 = vpack.c.b16 %v199, %v198
    %v203 = vpack.c.b16 %v201, %v200
    %v207 = vsel %vm124, %v182, 0
    %209 = vmatprep.subr.bf16.mxu0 0
    %210 = vmatpush1.bf16.msra.mxu0 %v202
    %211 = vmatprep.subr.bf16.mxu0 0
    %212 = vmatpush1.bf16.msra.mxu0 %v203
    %213 = vmatprep.subr.bf16.mxu0 0
    %214 = vmatpush1.bf16.msra.mxu0 0
    %215 = vmatprep.subr.bf16.mxu0 0
    %216 = vmatpush1.bf16.msra.mxu0 0
    %217 = vmatprep.subr.bf16.mxu0 0
    %218 = vmatpush1.bf16.msra.mxu0 0
    %219 = vmatprep.subr.bf16.mxu0 0
    %220 = vmatpush1.bf16.msra.mxu0 0
    %221 = vmatprep.subr.bf16.mxu0 0
    %222 = vmatpush1.bf16.msra.mxu0 0
    %223 = vmatprep.subr.bf16.mxu0 0
    %224 = vmatpush1.bf16.msra.mxu0 0
    %225 = vmatprep.subr.bf16.mxu0 0
    %226 = vmatpush1.bf16.msra.mxu0 0
    %227 = vmatprep.subr.bf16.mxu0 0
    %228 = vmatpush1.bf16.msra.mxu0 0
    %229 = vmatprep.subr.bf16.mxu0 0
    %230 = vmatpush1.bf16.msra.mxu0 0
    %231 = vmatprep.subr.bf16.mxu0 0
    %232 = vmatpush1.bf16.msra.mxu0 0
    %233 = vmatprep.subr.bf16.mxu0 0
    %234 = vmatpush1.bf16.msra.mxu0 0
    %235 = vmatprep.subr.bf16.mxu0 0
    %236 = vmatpush1.bf16.msra.mxu0 0
    %237 = vmatprep.subr.bf16.mxu0 0
    %238 = vmatpush1.bf16.msra.mxu0 0
    %239 = vmatprep.subr.bf16.mxu0 0
    %240 = vmatpush1.bf16.msra.mxu0 0
    %241 = vmatprep.mubr.bf16.mxu0 0
    %242 = vmatmul.mubr.bf16.gmra.mrb[0].mxu0 %v207
    %v243 = vpop.f32.mrb[0].mxu0
    %v244 = vadd.f32 %v192, %v243
    %v245 = vpop.f32.mrb[0].mxu0
    %v246 = vpop.f32.mrb[0].mxu0
    %v247 = vadd.f32 %v192, %v246
    %v248 = vpop.f32.mrb[0].mxu0
    %249 = vdwg.mxu0
    %v250 = vpack.c.bf16 %v247, %v244
    %v252 = vunpack.c.l.b16 %v250
    %v253 = vunpack.c.h.b16 %v250
    %v254 = vpack.c.b16 %v252, %v252
    %v255 = vpack.c.b16 %v253, %v253
    %258 = vst.msk [vmem:[%s10] sm:$0xf] %vm177, %v254
    %259 = vst.msk [vmem:[%s10 + $0x4] sm:$0xf] %vm177, %v255
    %v260 = vld [vmem:[%s2] sm:$0xff]
    %v261 = vld [vmem:[%s2 + $0x8] sm:$0xff]
    %v262 = vpack.c.bf16 %v261, %v260
    %v263 = vld [vmem:[#allocation4] sm:$0xf]
    %v264 = vld [vmem:[#allocation4 + $0x4] sm:$0xf]
    %v265 = vld [vmem:[#allocation4 + $0x8] sm:$0xf]
    %v266 = vld [vmem:[#allocation4 + $0xc] sm:$0xf]
    %v267 = vld [vmem:[#allocation9] sm:$0x1]
    %v269 = vlaneseq
    %v270 = vshrl.u32 %v269, 7
    %v271 = vsub.s32 0, %v270
    %v272 = vrot.slane %v267, %v271
    %v278 = vunpack.c.l.b16 %v263
    %v279 = vunpack.c.l.b16 %v264
    %v280 = vunpack.c.l.b16 %v265
    %v281 = vunpack.c.l.b16 %v266
    %v282 = vpack.c.b16 %v279, %v278
    %v283 = vpack.c.b16 %v281, %v280
    %v287 = vsel %vm124, %v262, 0
    %289 = vmatprep.subr.bf16.mxu0 0
    %290 = vmatpush1.bf16.msra.mxu0 %v282
    %291 = vmatprep.subr.bf16.mxu0 0
    %292 = vmatpush1.bf16.msra.mxu0 %v283
    %293 = vmatprep.subr.bf16.mxu0 0
    %294 = vmatpush1.bf16.msra.mxu0 0
    %295 = vmatprep.subr.bf16.mxu0 0
    %296 = vmatpush1.bf16.msra.mxu0 0
    %297 = vmatprep.subr.bf16.mxu0 0
    %298 = vmatpush1.bf16.msra.mxu0 0
    %299 = vmatprep.subr.bf16.mxu0 0
    %300 = vmatpush1.bf16.msra.mxu0 0
    %301 = vmatprep.subr.bf16.mxu0 0
    %302 = vmatpush1.bf16.msra.mxu0 0
    %303 = vmatprep.subr.bf16.mxu0 0
    %304 = vmatpush1.bf16.msra.mxu0 0
    %305 = vmatprep.subr.bf16.mxu0 0
    %306 = vmatpush1.bf16.msra.mxu0 0
    %307 = vmatprep.subr.bf16.mxu0 0
    %308 = vmatpush1.bf16.msra.mxu0 0
    %309 = vmatprep.subr.bf16.mxu0 0
    %310 = vmatpush1.bf16.msra.mxu0 0
    %311 = vmatprep.subr.bf16.mxu0 0
    %312 = vmatpush1.bf16.msra.mxu0 0
    %313 = vmatprep.subr.bf16.mxu0 0
    %314 = vmatpush1.bf16.msra.mxu0 0
    %315 = vmatprep.subr.bf16.mxu0 0
    %316 = vmatpush1.bf16.msra.mxu0 0
    %317 = vmatprep.subr.bf16.mxu0 0
    %318 = vmatpush1.bf16.msra.mxu0 0
    %319 = vmatprep.subr.bf16.mxu0 0
    %320 = vmatpush1.bf16.msra.mxu0 0
    %321 = vmatprep.mubr.bf16.mxu0 0
    %322 = vmatmul.mubr.bf16.gmra.mrb[0].mxu0 %v287
    %v323 = vpop.f32.mrb[0].mxu0
    %v324 = vadd.f32 %v272, %v323
    %v325 = vpop.f32.mrb[0].mxu0
    %v326 = vpop.f32.mrb[0].mxu0
    %v327 = vadd.f32 %v272, %v326
    %v328 = vpop.f32.mrb[0].mxu0
    %329 = vdwg.mxu0
    %v330 = vpack.c.bf16 %v327, %v324
    %v332 = vunpack.c.l.b16 %v330
    %v333 = vunpack.c.h.b16 %v330
    %v334 = vpack.c.b16 %v332, %v332
    %v335 = vpack.c.b16 %v333, %v333
    %338 = vst.msk [vmem:[%s11] sm:$0xf] %vm177, %v334
    %339 = vst.msk [vmem:[%s11 + $0x4] sm:$0xf] %vm177, %v335
    // Predicated region
    $region58: #{multi_head_attention.3} parent=1 // pred_check
      _
    $region59: #{multi_head_attention.3} parent=1 // pred_check_branch
      %341 = sbr.rel (0) target = $region61
    $region60: #{multi_head_attention.3} parent=1 // pred_region
      _
    $region61: #{multi_head_attention.3} parent=1 // pred_fallthru
      _
    // Predicated region
    $region62: #{multi_head_attention.3} parent=1 // pred_check
      _
    $region63: #{multi_head_attention.3} parent=1 // pred_check_branch
      %343 = sbr.rel (0) target = $region65
    $region64: #{multi_head_attention.3} parent=1 // pred_region
      _
    $region65: #{multi_head_attention.3} parent=1 // pred_fallthru
      _
    // Predicated region
    $region66: #{multi_head_attention.3} parent=1 // pred_check
      _
    $region67: #{multi_head_attention.3} parent=1 // pred_check_branch
      %345 = sbr.rel (0) target = $region69
    $region68: #{multi_head_attention.3} parent=1 // pred_region
      _
    $region69: #{multi_head_attention.3} parent=1 // pred_fallthru
      _
    // Predicated region
    $region70: #{multi_head_attention.3} parent=1 // pred_check
      _
    $region71: #{multi_head_attention.3} parent=1 // pred_check_branch
      %347 = sbr.rel (0) target = $region73
    $region72: #{multi_head_attention.3} parent=1 // pred_region
      _
    $region73: #{multi_head_attention.3} parent=1 // pred_fallthru
      _
    // Predicated region
    $region74: #{multi_head_attention.3} parent=1 // pred_check
      _
    $region75: #{multi_head_attention.3} parent=1 // pred_check_branch
      %349 = sbr.rel (0) target = $region77
    $region76: #{multi_head_attention.3} parent=1 // pred_region
      _
    $region77: #{multi_head_attention.3} parent=1 // pred_fallthru
      _
    // Predicated region
    $region78: #{multi_head_attention.3} parent=1 // pred_check
      _
    $region79: #{multi_head_attention.3} parent=1 // pred_check_branch
      %351 = sbr.rel (0) target = $region81
    $region80: #{multi_head_attention.3} parent=1 // pred_region
      _
    $region81: #{multi_head_attention.3} parent=1 // pred_fallthru
      _
    %352 = vsyncpa [#allocation3], 1
    %353 = vsyncpa [#allocation5], 1
    %354 = vsyncpa [#allocation8], 1

// kernel: multi_head_attention.4
$region0: #{multi_head_attention.4}
  #allocation0 [shape = 'u32[]', space=smem, size = 0x4, offset = 0x4, fixed_abs, tag = 'smem constant byte address 0x4 - core index']
  #allocation1 [shape = 'u32[144,128]{1,0:T(1,128)}', space=vmem, size = 0x12000, scoped, tag = 'internal scratch']
  %s0 = inlined_call_operand.vmem [shape: bf16[2,8,32], index: 0, kind: input, shape index: {}]
  %s1 = inlined_call_operand.vmem [shape: bf16[2,8,32], index: 1, kind: input, shape index: {}]
  %s2 = inlined_call_operand.vmem [shape: bf16[2,8,32], index: 2, kind: input, shape index: {}]
  %s3 = inlined_call_operand.vmem [shape: s8[2,8,8], index: 3, kind: input, shape index: {}]
  %s4 = inlined_call_operand.vmem [shape: bf16[2,8,32], index: 4, kind: output, shape index: {0}]
  %s5 = inlined_call_operand.hbm [shape: f32[4,2,8,8], index: 5, kind: output, shape index: {1}]
  %6 = xla_tuple %s4, %s5
  %s7 = sld [smem:[#allocation0]]
  $region57: #{multi_head_attention.4} parent=0
    _
  %s9 = ssub.s32 1, %s7
  %s10 = scalar_select 0, %s9, %s7
  $region1: #{multi_head_attention.4} parent=0
    #allocation2 [shape = 'u8[32768]{0}', space=vmem, size = 0x8000, scoped, tag = 'output window, operand 1']
    #allocation3 [shape = 's32[2]{0}', space=sflag, size = 0x8, scoped, tag = 'scoped memory for multi_head_attention.4']
    %11 = vsyncpa [#allocation3], 0
    %s12 = scalar_lea.sflag [#allocation3], 1
    %13 = vsyncpa %s12, 0
    loop: start=0, step=1, limit=4
    $region2: #{multi_head_attention.4} parent=1 // loop_pre_header
      _
    $region3: #{multi_head_attention.4} parent=1 // loop_header
      %s15 = sphi 0, %s19
      %p16 = scmp.ge.s32.totalorder %s15, 4
      %s22 = sphi 0, %s34
      %s23 = sphi 0, %s30
      %s24 = sphi 0, %s22
      %s25 = sphi 0, %s23
      %s26 = sphi 0, %s24
      %s27 = sphi 0, %s25
      %s39 = sphi 0, %s41
      %s42 = sphi 0, %s39
      %s43 = sphi 0, %s42
      %s59 = sphi 0, %s43
      %s65 = sphi 0, %s67
      %s68 = sphi 0, %s65
      %s69 = sphi 0, %s68
      %s85 = sphi 0, %s69
      %s91 = sphi 0, %s93
      %s94 = sphi 0, %s91
      %s95 = sphi 0, %s94
      %s111 = sphi 0, %s95
      %s119 = sphi 0, %s121
      %s122 = sphi 0, %s119
      %s123 = sphi 0, %s122
      %s139 = sphi 0, %s123
      %s147 = sphi 0, %s149
      %s150 = sphi 0, %s147
      %s151 = sphi 0, %s150
      %s167 = sphi 0, %s151
      %s175 = sphi 0, %s177
      %s178 = sphi 0, %s175
      %s179 = sphi 0, %s178
      %s195 = sphi 0, %s179
    $region4: #{multi_head_attention.4} parent=1 // loop_header_branch
      %18 = sbr.rel (%p16) target = $region8
    $region5: #{multi_head_attention.4} parent=1 // loop_body
      %s20 = ssub.s32 %s15, 1
      %s21 = ssub.s32 %s15, 2
      %s28 = sadd.s32 1, %s23
      %p29 = scmp.ge.s32.totalorder %s28, 1
      %s30 = scalar_select %p29, 0, %s28
      %s31 = sadd.s32 1, %s22
      %s32 = scalar_select %p29, %s31, %s22
      %p33 = scmp.ge.s32.totalorder %s32, 2
      %s34 = scalar_select %p33, 0, %s32
      %s35 = ssub.s32 %s22, %s34
      %s36 = ssub.s32 %s23, %s30
      %s37 = sor.u32 %s35, %s36
      %p38 = scmp.eq.s32.totalorder %s37, 0
      %s40 = sadd.s32 %s39, 1
      %s41 = scalar_select %p38, %s39, %s40
      %p44 = pneg %p38
      %p45 = scmp.eq.s32.totalorder %s15, 1
      %p46 = por %p44, %p45
      %p47 = scmp.ne.s32.totalorder %s39, %s42
      %p48 = scmp.eq.s32.totalorder %s15, 0
      %p49 = por %p47, %p48
      %p50 = scmp.ne.s32.totalorder %s39, %s42
      %p51 = scmp.eq.s32.totalorder %s20, 1
      %p52 = por %p50, %p51
      %p53 = scmp.ne.s32.totalorder %s42, %s43
      %p54 = scmp.eq.s32.totalorder %s20, 0
      %p55 = por %p53, %p54
      %p56 = scmp.ne.s32.totalorder %s42, %s43
      %p57 = scmp.eq.s32.totalorder %s21, 1
      %p58 = por %p56, %p57
      %p60 = scmp.ne.s32.totalorder %s43, %s59
      %p61 = scmp.eq.s32.totalorder %s21, 0
      %p62 = por %p60, %p61
      %s63 = ssub.s32 %s22, %s34
      %p64 = scmp.eq.s32.totalorder %s63, 0
      %s66 = sadd.s32 %s65, 1
      %s67 = scalar_select %p64, %s65, %s66
      %p70 = pneg %p64
      %p71 = scmp.eq.s32.totalorder %s15, 1
      %p72 = por %p70, %p71
      %p73 = scmp.ne.s32.totalorder %s65, %s68
      %p74 = scmp.eq.s32.totalorder %s15, 0
      %p75 = por %p73, %p74
      %p76 = scmp.ne.s32.totalorder %s65, %s68
      %p77 = scmp.eq.s32.totalorder %s20, 1
      %p78 = por %p76, %p77
      %p79 = scmp.ne.s32.totalorder %s68, %s69
      %p80 = scmp.eq.s32.totalorder %s20, 0
      %p81 = por %p79, %p80
      %p82 = scmp.ne.s32.totalorder %s68, %s69
      %p83 = scmp.eq.s32.totalorder %s21, 1
      %p84 = por %p82, %p83
      %p86 = scmp.ne.s32.totalorder %s69, %s85
      %p87 = scmp.eq.s32.totalorder %s21, 0
      %p88 = por %p86, %p87
      %s89 = ssub.s32 %s22, %s34
      %p90 = scmp.eq.s32.totalorder %s89, 0
      %s92 = sadd.s32 %s91, 1
      %s93 = scalar_select %p90, %s91, %s92
      %p96 = pneg %p90
      %p97 = scmp.eq.s32.totalorder %s15, 1
      %p98 = por %p96, %p97
      %p99 = scmp.ne.s32.totalorder %s91, %s94
      %p100 = scmp.eq.s32.totalorder %s15, 0
      %p101 = por %p99, %p100
      %p102 = scmp.ne.s32.totalorder %s91, %s94
      %p103 = scmp.eq.s32.totalorder %s20, 1
      %p104 = por %p102, %p103
      %p105 = scmp.ne.s32.totalorder %s94, %s95
      %p106 = scmp.eq.s32.totalorder %s20, 0
      %p107 = por %p105, %p106
      %p108 = scmp.ne.s32.totalorder %s94, %s95
      %p109 = scmp.eq.s32.totalorder %s21, 1
      %p110 = por %p108, %p109
      %p112 = scmp.ne.s32.totalorder %s95, %s111
      %p113 = scmp.eq.s32.totalorder %s21, 0
      %p114 = por %p112, %p113
      %s115 = ssub.s32 %s22, %s34
      %s116 = ssub.s32 %s23, %s30
      %s117 = sor.u32 %s115, %s116
      %p118 = scmp.eq.s32.totalorder %s117, 0
      %s120 = sadd.s32 %s119, 1
      %s121 = scalar_select %p118, %s119, %s120
      %p124 = pneg %p118
      %p125 = scmp.eq.s32.totalorder %s15, 1
      %p126 = por %p124, %p125
      %p127 = scmp.ne.s32.totalorder %s119, %s122
      %p128 = scmp.eq.s32.totalorder %s15, 0
      %p129 = por %p127, %p128
      %p130 = scmp.ne.s32.totalorder %s119, %s122
      %p131 = scmp.eq.s32.totalorder %s20, 1
      %p132 = por %p130, %p131
      %p133 = scmp.ne.s32.totalorder %s122, %s123
      %p134 = scmp.eq.s32.totalorder %s20, 0
      %p135 = por %p133, %p134
      %p136 = scmp.ne.s32.totalorder %s122, %s123
      %p137 = scmp.eq.s32.totalorder %s21, 1
      %p138 = por %p136, %p137
      %p140 = scmp.ne.s32.totalorder %s123, %s139
      %p141 = scmp.eq.s32.totalorder %s21, 0
      %p142 = por %p140, %p141
      %s143 = ssub.s32 %s22, %s34
      %s144 = ssub.s32 %s23, %s30
      %s145 = sor.u32 %s143, %s144
      %p146 = scmp.eq.s32.totalorder %s145, 0
      %s148 = sadd.s32 %s147, 1
      %s149 = scalar_select %p146, %s147, %s148
      %p152 = pneg %p146
      %p153 = scmp.eq.s32.totalorder %s15, 1
      %p154 = por %p152, %p153
      %p155 = scmp.ne.s32.totalorder %s147, %s150
      %p156 = scmp.eq.s32.totalorder %s15, 0
      %p157 = por %p155, %p156
      %p158 = scmp.ne.s32.totalorder %s147, %s150
      %p159 = scmp.eq.s32.totalorder %s20, 1
      %p160 = por %p158, %p159
      %p161 = scmp.ne.s32.totalorder %s150, %s151
      %p162 = scmp.eq.s32.totalorder %s20, 0
      %p163 = por %p161, %p162
      %p164 = scmp.ne.s32.totalorder %s150, %s151
      %p165 = scmp.eq.s32.totalorder %s21, 1
      %p166 = por %p164, %p165
      %p168 = scmp.ne.s32.totalorder %s151, %s167
      %p169 = scmp.eq.s32.totalorder %s21, 0
      %p170 = por %p168, %p169
      %s171 = ssub.s32 %s22, %s34
      %s172 = ssub.s32 %s23, %s30
      %s173 = sor.u32 %s171, %s172
      %p174 = scmp.eq.s32.totalorder %s173, 0
      %s176 = sadd.s32 %s175, 1
      %s177 = scalar_select %p174, %s175, %s176
      %p180 = pneg %p174
      %p181 = scmp.eq.s32.totalorder %s15, 1
      %p182 = por %p180, %p181
      %p183 = scmp.ne.s32.totalorder %s175, %s178
      %p184 = scmp.eq.s32.totalorder %s15, 0
      %p185 = por %p183, %p184
      %p186 = scmp.ne.s32.totalorder %s175, %s178
      %p187 = scmp.eq.s32.totalorder %s20, 1
      %p188 = por %p186, %p187
      %p189 = scmp.ne.s32.totalorder %s178, %s179
      %p190 = scmp.eq.s32.totalorder %s20, 0
      %p191 = por %p189, %p190
      %p192 = scmp.ne.s32.totalorder %s178, %s179
      %p193 = scmp.eq.s32.totalorder %s21, 1
      %p194 = por %p192, %p193
      %p196 = scmp.ne.s32.totalorder %s179, %s195
      %p197 = scmp.eq.s32.totalorder %s21, 0
      %p198 = por %p196, %p197
      %p199 = scmp.le.s32.totalorder 1, %s15
      %p200 = scmp.lt.s32.totalorder %s15, 3
      %p201 = pnand %p199, %p200
      %p202 = pneg %p201
      // Predicated region
      $region9: #{multi_head_attention.4} parent=5 // pred_check
        _
      $region10: #{multi_head_attention.4} parent=5 // pred_check_branch
        %204 = sbr.rel (%p201) target = $region12
      $region11: #{multi_head_attention.4} parent=5 // pred_region
        %s205 = ssub.s32 %s15, 1
      $region12: #{multi_head_attention.4} parent=5 // pred_fallthru
        _
      %p206 = scmp.lt.s32.totalorder %s15, 2
      // Predicated region
      $region13: #{multi_head_attention.4} parent=5 // pred_check
        %p207 = pneg %p206
      $region14: #{multi_head_attention.4} parent=5 // pred_check_branch
        %209 = sbr.rel (%p207) target = $region16
      $region15: #{multi_head_attention.4} parent=5 // pred_region
        // Predicated region
        $region17: #{multi_head_attention.4} parent=15 // pred_check
          %p210 = pneg %p49
        $region18: #{multi_head_attention.4} parent=15 // pred_check_branch
          %212 = sbr.rel (%p210) target = $region20
        $region19: #{multi_head_attention.4} parent=15 // pred_region
          %p213 = scmp.lt.s32.totalorder %s22, 1
          %s214 = scalar_select %p213, %s22, 1
          %p215 = scmp.lt.s32.totalorder %s23, 0
          %s216 = scalar_select %p215, %s23, 0
          %s217 = sadd.s32 %s216, %s214
          %s218 = smul.addr %s217, 4
          %s219 = scalar_lea.vmem %s0, %s218
        $region20: #{multi_head_attention.4} parent=15 // pred_fallthru
          _
        // Predicated region
        $region21: #{multi_head_attention.4} parent=15 // pred_check
          %p220 = pneg %p75
        $region22: #{multi_head_attention.4} parent=15 // pred_check_branch
          %222 = sbr.rel (%p220) target = $region24
        $region23: #{multi_head_attention.4} parent=15 // pred_region
          %p223 = scmp.lt.s32.totalorder %s22, 1
          %s224 = scalar_select %p223, %s22, 1
          %s225 = smul.addr %s224, 4
          %s226 = scalar_lea.vmem %s1, %s225
        $region24: #{multi_head_attention.4} parent=15 // pred_fallthru
          _
        // Predicated region
        $region25: #{multi_head_attention.4} parent=15 // pred_check
          %p227 = pneg %p101
        $region26: #{multi_head_attention.4} parent=15 // pred_check_branch
          %229 = sbr.rel (%p227) target = $region28
        $region27: #{multi_head_attention.4} parent=15 // pred_region
          %p230 = scmp.lt.s32.totalorder %s22, 1
          %s231 = scalar_select %p230, %s22, 1
          %s232 = smul.addr %s231, 4
          %s233 = scalar_lea.vmem %s2, %s232
        $region28: #{multi_head_attention.4} parent=15 // pred_fallthru
          _
        // Predicated region
        $region29: #{multi_head_attention.4} parent=15 // pred_check
          %p234 = pneg %p129
        $region30: #{multi_head_attention.4} parent=15 // pred_check_branch
          %236 = sbr.rel (%p234) target = $region32
        $region31: #{multi_head_attention.4} parent=15 // pred_region
          %p237 = scmp.lt.s32.totalorder %s22, 1
          %s238 = scalar_select %p237, %s22, 1
          %p239 = scmp.lt.s32.totalorder %s23, 0
          %s240 = scalar_select %p239, %s23, 0
          %s241 = sadd.s32 %s240, %s238
          %s242 = smul.addr %s241, 2
          %s243 = scalar_lea.vmem %s3, %s242
        $region32: #{multi_head_attention.4} parent=15 // pred_fallthru
          _
      $region16: #{multi_head_attention.4} parent=5 // pred_fallthru
        _
      %p244 = scmp.le.s32.totalorder 1, %s15
      %p245 = scmp.lt.s32.totalorder %s15, 3
      %p246 = pnand %p244, %p245
      %p247 = pneg %p246
      // Predicated region
      $region33: #{multi_head_attention.4} parent=5 // pred_check
        _
      $region34: #{multi_head_attention.4} parent=5 // pred_check_branch
        %249 = sbr.rel (%p246) target = $region36
      $region35: #{multi_head_attention.4} parent=5 // pred_region
        %s250 = ssub.s32 %s15, 1
        %p251 = scmp.lt.s32.totalorder %s24, 1
        %s252 = scalar_select %p251, %s24, 1
        %p253 = scmp.lt.s32.totalorder %s25, 0
        %s254 = scalar_select %p253, %s25, 0
        %s255 = sadd.s32 %s254, %s252
        %s256 = smul.addr %s255, 4
        %s257 = scalar_lea.vmem %s0, %s256
        %p258 = pneg %p55
        %p259 = pneg %p52
        %p260 = scmp.lt.s32.totalorder %s24, 1
        %s261 = scalar_select %p260, %s24, 1
        %s262 = smul.addr %s261, 4
        %s263 = scalar_lea.vmem %s1, %s262
        %p264 = pneg %p81
        %p265 = pneg %p78
        %p266 = scmp.lt.s32.totalorder %s24, 1
        %s267 = scalar_select %p266, %s24, 1
        %s268 = smul.addr %s267, 4
        %s269 = scalar_lea.vmem %s2, %s268
        %p270 = pneg %p107
        %p271 = pneg %p104
        %p272 = scmp.lt.s32.totalorder %s24, 1
        %s273 = scalar_select %p272, %s24, 1
        %p274 = scmp.lt.s32.totalorder %s25, 0
        %s275 = scalar_select %p274, %s25, 0
        %s276 = sadd.s32 %s275, %s273
        %s277 = smul.addr %s276, 2
        %s278 = scalar_lea.vmem %s3, %s277
        %p279 = pneg %p135
        %p280 = pneg %p132
        %p281 = pneg %p163
        %p282 = pneg %p160
        %p283 = scmp.lt.s32.totalorder %s24, 1
        %s284 = scalar_select %p283, %s24, 1
        %p285 = scmp.lt.s32.totalorder %s25, 0
        %s286 = scalar_select %p285, %s25, 0
        %s287 = sadd.s32 %s286, %s284
        %s288 = smul.addr %s287, 4
        %s289 = scalar_lea.vmem %s4, %s288
        %p290 = pneg %p191
        %p291 = pneg %p188
        %s292 = sand.u32 %s178, 1
        %s293 = scalar_lea.sflag [#allocation3], %s292
        %s294 = sand.u32 %s178, 1
        %s295 = smul.addr %s294, 32
        %s296 = scalar_lea.vmem [#allocation2], %s295
        %p297 = scmp.lt.s32.totalorder %s24, 1
        %s298 = scalar_select %p297, %s24, 1
        %p299 = scmp.lt.s32.totalorder %s25, 0
        %s300 = scalar_select %p299, %s25, 0
        %s301 = sadd.s32 %s300, %s298
        %s302 = smul.addr %s301, 4
        %s303 = scalar_lea.vmem %s0, %s302
        %p304 = scmp.lt.s32.totalorder %s24, 1
        %s305 = scalar_select %p304, %s24, 1
        %s306 = smul.addr %s305, 4
        %s307 = scalar_lea.vmem %s1, %s306
        %p308 = scmp.lt.s32.totalorder %s24, 1
        %s309 = scalar_select %p308, %s24, 1
        %s310 = smul.addr %s309, 4
        %s311 = scalar_lea.vmem %s2, %s310
        %p312 = scmp.lt.s32.totalorder %s24, 1
        %s313 = scalar_select %p312, %s24, 1
        %p314 = scmp.lt.s32.totalorder %s25, 0
        %s315 = scalar_select %p314, %s25, 0
        %s316 = sadd.s32 %s315, %s313
        %s317 = smul.addr %s316, 2
        %s318 = scalar_lea.vmem %s3, %s317
        %p319 = scmp.lt.s32.totalorder %s24, 1
        %s320 = scalar_select %p319, %s24, 1
        %p321 = scmp.lt.s32.totalorder %s25, 0
        %s322 = scalar_select %p321, %s25, 0
        %s323 = sadd.s32 %s322, %s320
        %s324 = smul.addr %s323, 4
        %s325 = scalar_lea.vmem %s4, %s324
        %v330 = vld [vmem:[%s318] sm:$0x3]
        %vm331 = vnez %v330
        %v332 = vld [vmem:[%s303] sm:$0xf]
        %v333 = vmul.bf16 %v332, 1052065461
        %v334 = vld [vmem:[%s307] sm:$0xf]
        %v335 = vld [vmem:[%s311] sm:$0xf]
        %vm336 = vcmask 64512
        %v338 = vsel %vm336, %v333, 0
        %v341 = vsel %vm336, %v334, 0
        %343 = vmatprep.subr.bf16.mxu0 0
        %344 = vmatpush1.bf16.xpose.msra.mxu0 %v341
        %345 = vmatprep.subr.bf16.mxu0 0
        %346 = vmatpush1.bf16.xpose.msra.mxu0 0
        %347 = vmatprep.subr.bf16.mxu0 0
        %348 = vmatpush1.bf16.xpose.msra.mxu0 0
        %349 = vmatprep.subr.bf16.mxu0 0
        %350 = vmatpush1.bf16.xpose.msra.mxu0 0
        %351 = vmatprep.subr.bf16.mxu0 0
        %352 = vmatpush1.bf16.xpose.msra.mxu0 0
        %353 = vmatprep.subr.bf16.mxu0 0
        %354 = vmatpush1.bf16.xpose.msra.mxu0 0
        %355 = vmatprep.subr.bf16.mxu0 0
        %356 = vmatpush1.bf16.xpose.msra.mxu0 0
        %357 = vmatprep.subr.bf16.mxu0 0
        %358 = vmatpush1.bf16.xpose.msra.mxu0 0
        %359 = vmatprep.subr.bf16.mxu0 0
        %360 = vmatpush1.bf16.xpose.msra.mxu0 0
        %361 = vmatprep.subr.bf16.mxu0 0
        %362 = vmatpush1.bf16.xpose.msra.mxu0 0
        %363 = vmatprep.subr.bf16.mxu0 0
        %364 = vmatpush1.bf16.xpose.msra.mxu0 0
        %365 = vmatprep.subr.bf16.mxu0 0
        %366 = vmatpush1.bf16.xpose.msra.mxu0 0
        %367 = vmatprep.subr.bf16.mxu0 0
        %368 = vmatpush1.bf16.xpose.msra.mxu0 0
        %369 = vmatprep.subr.bf16.mxu0 0
        %370 = vmatpush1.bf16.xpose.msra.mxu0 0
        %371 = vmatprep.subr.bf16.mxu0 0
        %372 = vmatpush1.bf16.xpose.msra.mxu0 0
        %373 = vmatprep.subr.bf16.mxu0 0
        %374 = vmatpush1.bf16.xpose.msra.mxu0 0
        %375 = vmatprep.mubr.bf16.mxu0 0
        %376 = vmatmul.mubr.bf16.gmra.mrb[0].mxu0 %v338
        %v377 = vpop.f32.mrb[0].mxu0
        %v378 = vadd.f32 0.0, %v377
        %v379 = vpop.f32.mrb[0].mxu0
        %v380 = vpop.f32.mrb[0].mxu0
        %v381 = vpop.f32.mrb[0].mxu0
        %382 = vdwg.mxu0
        %v383 = vsel %vm331, 16843009, 0
        %v384 = vunpack.c.0.s8 %v383
        %vm385 = vcmp.ne.s32.totalorder %v384, 0
        %v386 = vsel %vm385, -1e+30, %v378
        %v387 = vsel %vm336, %v386, -inf
        %388 = vmax.xlane.f32.xlu0 %v387
        %v389 = vpop.xlane.xlu0 %388
        %v390 = vsub.f32 %v386, %v389
        %v391 = vmul.f32 %v390, 1.442695
        %v392 = vpow.pop %v391
        %v393 = vsel %vm336, %v392, 0.0
        %394 = vadd.xlane.f32.xlu0 %v393
        %v395 = vpop.xlane.xlu0 %394
        %v396 = vrcp.pop %v395
        %v397 = vmul.f32 %v392, %v396
        %398 = vst.msk [vmem:[%s296] sm:$0xff] %vm336, %v397
        %v399 = vpack.c.bf16 %v397, %v397
        %v401 = vsel %vm336, %v399, 0
        %vm403 = vcmask 1043456
        %v405 = vsel %vm403, %v335, 0
        %407 = vmatprep.subr.bf16.mxu0 0
        %408 = vmatpush1.bf16.msra.mxu0 %v405
        %409 = vmatprep.subr.bf16.mxu0 0
        %410 = vmatpush1.bf16.msra.mxu0 0
        %411 = vmatprep.subr.bf16.mxu0 0
        %412 = vmatpush1.bf16.msra.mxu0 0
        %413 = vmatprep.subr.bf16.mxu0 0
        %414 = vmatpush1.bf16.msra.mxu0 0
        %415 = vmatprep.subr.bf16.mxu0 0
        %416 = vmatpush1.bf16.msra.mxu0 0
        %417 = vmatprep.subr.bf16.mxu0 0
        %418 = vmatpush1.bf16.msra.mxu0 0
        %419 = vmatprep.subr.bf16.mxu0 0
        %420 = vmatpush1.bf16.msra.mxu0 0
        %421 = vmatprep.subr.bf16.mxu0 0
        %422 = vmatpush1.bf16.msra.mxu0 0
        %423 = vmatprep.subr.bf16.mxu0 0
        %424 = vmatpush1.bf16.msra.mxu0 0
        %425 = vmatprep.subr.bf16.mxu0 0
        %426 = vmatpush1.bf16.msra.mxu0 0
        %427 = vmatprep.subr.bf16.mxu0 0
        %428 = vmatpush1.bf16.msra.mxu0 0
        %429 = vmatprep.subr.bf16.mxu0 0
        %430 = vmatpush1.bf16.msra.mxu0 0
        %431 = vmatprep.subr.bf16.mxu0 0
        %432 = vmatpush1.bf16.msra.mxu0 0
        %433 = vmatprep.subr.bf16.mxu0 0
        %434 = vmatpush1.bf16.msra.mxu0 0
        %435 = vmatprep.subr.bf16.mxu0 0
        %436 = vmatpush1.bf16.msra.mxu0 0
        %437 = vmatprep.subr.bf16.mxu0 0
        %438 = vmatpush1.bf16.msra.mxu0 0
        %439 = vmatprep.mubr.bf16.mxu0 0
        %440 = vmatmul.mubr.bf16.gmra.mrb[0].mxu0 %v401
        %v441 = vpop.f32.mrb[0].mxu0
        %v442 = vadd.f32 0.0, %v441
        %v443 = vpop.f32.mrb[0].mxu0
        %v444 = vpop.f32.mrb[0].mxu0
        %v445 = vpop.f32.mrb[0].mxu0
        %446 = vdwg.mxu0
        %v447 = vpack.c.bf16 %v442, %v442
        %vm448 = vcmask 60416
        %449 = vst.msk [vmem:[%s325] sm:$0xf] %vm448, %v447
        %v450 = vld [vmem:[%s303] sm:$0xf]
        %v451 = vmul.bf16 %v450, 1052065461
        %v452 = vld [vmem:[%s307] sm:$0xf]
        %v453 = vld [vmem:[%s311] sm:$0xf]
        %v455 = vunpack.c.l.b16 %v451
        %v456 = vpack.c.b16 %v455, %v455
        %457 = vrot.lane.b32.xlu0 %v456, 120
        %v458 = vpop.permute.xlu0 %457
        %v460 = vunpack.c.l.b16 %v452
        %v461 = vpack.c.b16 %v460, %v460
        %462 = vrot.lane.b32.xlu0 %v461, 120
        %v463 = vpop.permute.xlu0 %462
        %v465 = vsel %vm336, %v458, 0
        %v468 = vsel %vm336, %v463, 0
        %470 = vmatprep.subr.bf16.mxu0 0
        %471 = vmatpush1.bf16.xpose.msra.mxu0 %v468
        %472 = vmatprep.subr.bf16.mxu0 0
        %473 = vmatpush1.bf16.xpose.msra.mxu0 0
        %474 = vmatprep.subr.bf16.mxu0 0
        %475 = vmatpush1.bf16.xpose.msra.mxu0 0
        %476 = vmatprep.subr.bf16.mxu0 0
        %477 = vmatpush1.bf16.xpose.msra.mxu0 0
        %478 = vmatprep.subr.bf16.mxu0 0
        %479 = vmatpush1.bf16.xpose.msra.mxu0 0
        %480 = vmatprep.subr.bf16.mxu0 0
        %481 = vmatpush1.bf16.xpose.msra.mxu0 0
        %482 = vmatprep.subr.bf16.mxu0 0
        %483 = vmatpush1.bf16.xpose.msra.mxu0 0
        %484 = vmatprep.subr.bf16.mxu0 0
        %485 = vmatpush1.bf16.xpose.msra.mxu0 0
        %486 = vmatprep.subr.bf16.mxu0 0
        %487 = vmatpush1.bf16.xpose.msra.mxu0 0
        %488 = vmatprep.subr.bf16.mxu0 0
        %489 = vmatpush1.bf16.xpose.msra.mxu0 0
        %490 = vmatprep.subr.bf16.mxu0 0
        %491 = vmatpush1.bf16.xpose.msra.mxu0 0
        %492 = vmatprep.subr.bf16.mxu0 0
        %493 = vmatpush1.bf16.xpose.msra.mxu0 0
        %494 = vmatprep.subr.bf16.mxu0 0
        %495 = vmatpush1.bf16.xpose.msra.mxu0 0
        %496 = vmatprep.subr.bf16.mxu0 0
        %497 = vmatpush1.bf16.xpose.msra.mxu0 0
        %498 = vmatprep.subr.bf16.mxu0 0
        %499 = vmatpush1.bf16.xpose.msra.mxu0 0
        %500 = vmatprep.subr.bf16.mxu0 0
        %501 = vmatpush1.bf16.xpose.msra.mxu0 0
        %502 = vmatprep.mubr.bf16.mxu0 0
        %503 = vmatmul.mubr.bf16.gmra.mrb[0].mxu0 %v465
        %v504 = vpop.f32.mrb[0].mxu0
        %v505 = vadd.f32 0.0, %v504
        %v506 = vpop.f32.mrb[0].mxu0
        %v507 = vpop.f32.mrb[0].mxu0
        %v508 = vpop.f32.mrb[0].mxu0
        %509 = vdwg.mxu0
        %v510 = vsel %vm385, -1e+30, %v505
        %v511 = vsel %vm336, %v510, -inf
        %512 = vmax.xlane.f32.xlu0 %v511
        %v513 = vpop.xlane.xlu0 %512
        %v514 = vsub.f32 %v510, %v513
        %v515 = vmul.f32 %v514, 1.442695
        %v516 = vpow.pop %v515
        %v517 = vsel %vm336, %v516, 0.0
        %518 = vadd.xlane.f32.xlu0 %v517
        %v519 = vpop.xlane.xlu0 %518
        %v520 = vrcp.pop %v519
        %v521 = vmul.f32 %v516, %v520
        %s522 = scalar_lea.vmem %s296, 8 [#allocation2]
        %523 = vst.msk [vmem:[%s522] sm:$0xff] %vm336, %v521
        %v524 = vpack.c.bf16 %v521, %v521
        %v526 = vunpack.c.l.b16 %v453
        %v527 = vpack.c.b16 %v526, %v526
        %528 = vrot.lane.b32.xlu0 %v527, 120
        %v529 = vpop.permute.xlu0 %528
        %v531 = vsel %vm336, %v524, 0
        %v534 = vsel %vm403, %v529, 0
        %536 = vmatprep.subr.bf16.mxu0 0
        %537 = vmatpush1.bf16.msra.mxu0 %v534
        %538 = vmatprep.subr.bf16.mxu0 0
        %539 = vmatpush1.bf16.msra.mxu0 0
        %540 = vmatprep.subr.bf16.mxu0 0
        %541 = vmatpush1.bf16.msra.mxu0 0
        %542 = vmatprep.subr.bf16.mxu0 0
        %543 = vmatpush1.bf16.msra.mxu0 0
        %544 = vmatprep.subr.bf16.mxu0 0
        %545 = vmatpush1.bf16.msra.mxu0 0
        %546 = vmatprep.subr.bf16.mxu0 0
        %547 = vmatpush1.bf16.msra.mxu0 0
        %548 = vmatprep.subr.bf16.mxu0 0
        %549 = vmatpush1.bf16.msra.mxu0 0
        %550 = vmatprep.subr.bf16.mxu0 0
        %551 = vmatpush1.bf16.msra.mxu0 0
        %552 = vmatprep.subr.bf16.mxu0 0
        %553 = vmatpush1.bf16.msra.mxu0 0
        %554 = vmatprep.subr.bf16.mxu0 0
        %555 = vmatpush1.bf16.msra.mxu0 0
        %556 = vmatprep.subr.bf16.mxu0 0
        %557 = vmatpush1.bf16.msra.mxu0 0
        %558 = vmatprep.subr.bf16.mxu0 0
        %559 = vmatpush1.bf16.msra.mxu0 0
        %560 = vmatprep.subr.bf16.mxu0 0
        %561 = vmatpush1.bf16.msra.mxu0 0
        %562 = vmatprep.subr.bf16.mxu0 0
        %563 = vmatpush1.bf16.msra.mxu0 0
        %564 = vmatprep.subr.bf16.mxu0 0
        %565 = vmatpush1.bf16.msra.mxu0 0
        %566 = vmatprep.subr.bf16.mxu0 0
        %567 = vmatpush1.bf16.msra.mxu0 0
        %568 = vmatprep.mubr.bf16.mxu0 0
        %569 = vmatmul.mubr.bf16.gmra.mrb[0].mxu0 %v531
        %v570 = vpop.f32.mrb[0].mxu0
        %v571 = vadd.f32 0.0, %v570
        %v572 = vpop.f32.mrb[0].mxu0
        %v573 = vpop.f32.mrb[0].mxu0
        %v574 = vpop.f32.mrb[0].mxu0
        %575 = vdwg.mxu0
        %v576 = vpack.c.bf16 %v571, %v571
        %v578 = vunpack.c.l.b16 %v576
        %v579 = vpack.c.b16 %v578, %v578
        %580 = vrot.lane.b32.xlu0 %v579, 8
        %v581 = vpop.permute.xlu0 %580
        %vm583 = vcmask 126016
        %584 = vst.msk [vmem:[%s325] sm:$0xf] %vm583, %v581
        %v585 = vld [vmem:[%s303] sm:$0xf]
        %v586 = vmul.bf16 %v585, 1052065461
        %v587 = vld [vmem:[%s307] sm:$0xf]
        %v588 = vld [vmem:[%s311] sm:$0xf]
        %v590 = vunpack.c.l.b16 %v586
        %v591 = vpack.c.b16 %v590, %v590
        %592 = vrot.lane.b32.xlu0 %v591, 112
        %v593 = vpop.permute.xlu0 %592
        %v595 = vunpack.c.l.b16 %v587
        %v596 = vpack.c.b16 %v595, %v595
        %597 = vrot.lane.b32.xlu0 %v596, 112
        %v598 = vpop.permute.xlu0 %597
        %v600 = vsel %vm336, %v593, 0
        %v603 = vsel %vm336, %v598, 0
        %605 = vmatprep.subr.bf16.mxu0 0
        %606 = vmatpush1.bf16.xpose.msra.mxu0 %v603
        %607 = vmatprep.subr.bf16.mxu0 0
        %608 = vmatpush1.bf16.xpose.msra.mxu0 0
        %609 = vmatprep.subr.bf16.mxu0 0
        %610 = vmatpush1.bf16.xpose.msra.mxu0 0
        %611 = vmatprep.subr.bf16.mxu0 0
        %612 = vmatpush1.bf16.xpose.msra.mxu0 0
        %613 = vmatprep.subr.bf16.mxu0 0
        %614 = vmatpush1.bf16.xpose.msra.mxu0 0
        %615 = vmatprep.subr.bf16.mxu0 0
        %616 = vmatpush1.bf16.xpose.msra.mxu0 0
        %617 = vmatprep.subr.bf16.mxu0 0
        %618 = vmatpush1.bf16.xpose.msra.mxu0 0
        %619 = vmatprep.subr.bf16.mxu0 0
        %620 = vmatpush1.bf16.xpose.msra.mxu0 0
        %621 = vmatprep.subr.bf16.mxu0 0
        %622 = vmatpush1.bf16.xpose.msra.mxu0 0
        %623 = vmatprep.subr.bf16.mxu0 0
        %624 = vmatpush1.bf16.xpose.msra.mxu0 0
        %625 = vmatprep.subr.bf16.mxu0 0
        %626 = vmatpush1.bf16.xpose.msra.mxu0 0
        %627 = vmatprep.subr.bf16.mxu0 0
        %628 = vmatpush1.bf16.xpose.msra.mxu0 0
        %629 = vmatprep.subr.bf16.mxu0 0
        %630 = vmatpush1.bf16.xpose.msra.mxu0 0
        %631 = vmatprep.subr.bf16.mxu0 0
        %632 = vmatpush1.bf16.xpose.msra.mxu0 0
        %633 = vmatprep.subr.bf16.mxu0 0
        %634 = vmatpush1.bf16.xpose.msra.mxu0 0
        %635 = vmatprep.subr.bf16.mxu0 0
        %636 = vmatpush1.bf16.xpose.msra.mxu0 0
        %637 = vmatprep.mubr.bf16.mxu0 0
        %638 = vmatmul.mubr.bf16.gmra.mrb[0].mxu0 %v600
        %v639 = vpop.f32.mrb[0].mxu0
        %v640 = vadd.f32 0.0, %v639
        %v641 = vpop.f32.mrb[0].mxu0
        %v642 = vpop.f32.mrb[0].mxu0
        %v643 = vpop.f32.mrb[0].mxu0
        %644 = vdwg.mxu0
        %v645 = vsel %vm385, -1e+30, %v640
        %v646 = vsel %vm336, %v645, -inf
        %647 = vmax.xlane.f32.xlu0 %v646
        %v648 = vpop.xlane.xlu0 %647
        %v649 = vsub.f32 %v645, %v648
        %v650 = vmul.f32 %v649, 1.442695
        %v651 = vpow.pop %v650
        %v652 = vsel %vm336, %v651, 0.0
        %653 = vadd.xlane.f32.xlu0 %v652
        %v654 = vpop.xlane.xlu0 %653
        %v655 = vrcp.pop %v654
        %v656 = vmul.f32 %v651, %v655
        %s657 = scalar_lea.vmem %s296, 16 [#allocation2]
        %658 = vst.msk [vmem:[%s657] sm:$0xff] %vm336, %v656
        %v659 = vpack.c.bf16 %v656, %v656
        %v661 = vunpack.c.l.b16 %v588
        %v662 = vpack.c.b16 %v661, %v661
        %663 = vrot.lane.b32.xlu0 %v662, 112
        %v664 = vpop.permute.xlu0 %663
        %v666 = vsel %vm336, %v659, 0
        %v669 = vsel %vm403, %v664, 0
        %671 = vmatprep.subr.bf16.mxu0 0
        %672 = vmatpush1.bf16.msra.mxu0 %v669
        %673 = vmatprep.subr.bf16.mxu0 0
        %674 = vmatpush1.bf16.msra.mxu0 0
        %675 = vmatprep.subr.bf16.mxu0 0
        %676 = vmatpush1.bf16.msra.mxu0 0
        %677 = vmatprep.subr.bf16.mxu0 0
        %678 = vmatpush1.bf16.msra.mxu0 0
        %679 = vmatprep.subr.bf16.mxu0 0
        %680 = vmatpush1.bf16.msra.mxu0 0
        %681 = vmatprep.subr.bf16.mxu0 0
        %682 = vmatpush1.bf16.msra.mxu0 0
        %683 = vmatprep.subr.bf16.mxu0 0
        %684 = vmatpush1.bf16.msra.mxu0 0
        %685 = vmatprep.subr.bf16.mxu0 0
        %686 = vmatpush1.bf16.msra.mxu0 0
        %687 = vmatprep.subr.bf16.mxu0 0
        %688 = vmatpush1.bf16.msra.mxu0 0
        %689 = vmatprep.subr.bf16.mxu0 0
        %690 = vmatpush1.bf16.msra.mxu0 0
        %691 = vmatprep.subr.bf16.mxu0 0
        %692 = vmatpush1.bf16.msra.mxu0 0
        %693 = vmatprep.subr.bf16.mxu0 0
        %694 = vmatpush1.bf16.msra.mxu0 0
        %695 = vmatprep.subr.bf16.mxu0 0
        %696 = vmatpush1.bf16.msra.mxu0 0
        %697 = vmatprep.subr.bf16.mxu0 0
        %698 = vmatpush1.bf16.msra.mxu0 0
        %699 = vmatprep.subr.bf16.mxu0 0
        %700 = vmatpush1.bf16.msra.mxu0 0
        %701 = vmatprep.subr.bf16.mxu0 0
        %702 = vmatpush1.bf16.msra.mxu0 0
        %703 = vmatprep.mubr.bf16.mxu0 0
        %704 = vmatmul.mubr.bf16.gmra.mrb[0].mxu0 %v666
        %v705 = vpop.f32.mrb[0].mxu0
        %v706 = vadd.f32 0.0, %v705
        %v707 = vpop.f32.mrb[0].mxu0
        %v708 = vpop.f32.mrb[0].mxu0
        %v709 = vpop.f32.mrb[0].mxu0
        %710 = vdwg.mxu0
        %v711 = vpack.c.bf16 %v706, %v706
        %v713 = vunpack.c.l.b16 %v711
        %v714 = vpack.c.b16 %v713, %v713
        %715 = vrot.lane.b32.xlu0 %v714, 16
        %v716 = vpop.permute.xlu0 %715
        %vm718 = vcmask 191616
        %719 = vst.msk [vmem:[%s325] sm:$0xf] %vm718, %v716
        %v720 = vld [vmem:[%s303] sm:$0xf]
        %v721 = vmul.bf16 %v720, 1052065461
        %v722 = vld [vmem:[%s307] sm:$0xf]
        %v723 = vld [vmem:[%s311] sm:$0xf]
        %v725 = vunpack.c.l.b16 %v721
        %v726 = vpack.c.b16 %v725, %v725
        %727 = vrot.lane.b32.xlu0 %v726, 104
        %v728 = vpop.permute.xlu0 %727
        %v730 = vunpack.c.l.b16 %v722
        %v731 = vpack.c.b16 %v730, %v730
        %732 = vrot.lane.b32.xlu0 %v731, 104
        %v733 = vpop.permute.xlu0 %732
        %v735 = vsel %vm336, %v728, 0
        %v738 = vsel %vm336, %v733, 0
        %740 = vmatprep.subr.bf16.mxu0 0
        %741 = vmatpush1.bf16.xpose.msra.mxu0 %v738
        %742 = vmatprep.subr.bf16.mxu0 0
        %743 = vmatpush1.bf16.xpose.msra.mxu0 0
        %744 = vmatprep.subr.bf16.mxu0 0
        %745 = vmatpush1.bf16.xpose.msra.mxu0 0
        %746 = vmatprep.subr.bf16.mxu0 0
        %747 = vmatpush1.bf16.xpose.msra.mxu0 0
        %748 = vmatprep.subr.bf16.mxu0 0
        %749 = vmatpush1.bf16.xpose.msra.mxu0 0
        %750 = vmatprep.subr.bf16.mxu0 0
        %751 = vmatpush1.bf16.xpose.msra.mxu0 0
        %752 = vmatprep.subr.bf16.mxu0 0
        %753 = vmatpush1.bf16.xpose.msra.mxu0 0
        %754 = vmatprep.subr.bf16.mxu0 0
        %755 = vmatpush1.bf16.xpose.msra.mxu0 0
        %756 = vmatprep.subr.bf16.mxu0 0
        %757 = vmatpush1.bf16.xpose.msra.mxu0 0
        %758 = vmatprep.subr.bf16.mxu0 0
        %759 = vmatpush1.bf16.xpose.msra.mxu0 0
        %760 = vmatprep.subr.bf16.mxu0 0
        %761 = vmatpush1.bf16.xpose.msra.mxu0 0
        %762 = vmatprep.subr.bf16.mxu0 0
        %763 = vmatpush1.bf16.xpose.msra.mxu0 0
        %764 = vmatprep.subr.bf16.mxu0 0
        %765 = vmatpush1.bf16.xpose.msra.mxu0 0
        %766 = vmatprep.subr.bf16.mxu0 0
        %767 = vmatpush1.bf16.xpose.msra.mxu0 0
        %768 = vmatprep.subr.bf16.mxu0 0
        %769 = vmatpush1.bf16.xpose.msra.mxu0 0
        %770 = vmatprep.subr.bf16.mxu0 0
        %771 = vmatpush1.bf16.xpose.msra.mxu0 0
        %772 = vmatprep.mubr.bf16.mxu0 0
        %773 = vmatmul.mubr.bf16.gmra.mrb[0].mxu0 %v735
        %v774 = vpop.f32.mrb[0].mxu0
        %v775 = vadd.f32 0.0, %v774
        %v776 = vpop.f32.mrb[0].mxu0
        %v777 = vpop.f32.mrb[0].mxu0
        %v778 = vpop.f32.mrb[0].mxu0
        %779 = vdwg.mxu0
        %v780 = vsel %vm385, -1e+30, %v775
        %v781 = vsel %vm336, %v780, -inf
        %782 = vmax.xlane.f32.xlu0 %v781
        %v783 = vpop.xlane.xlu0 %782
        %v784 = vsub.f32 %v780, %v783
        %v785 = vmul.f32 %v784, 1.442695
        %v786 = vpow.pop %v785
        %v787 = vsel %vm336, %v786, 0.0
        %788 = vadd.xlane.f32.xlu0 %v787
        %v789 = vpop.xlane.xlu0 %788
        %v790 = vrcp.pop %v789
        %v791 = vmul.f32 %v786, %v790
        %s792 = scalar_lea.vmem %s296, 24 [#allocation2]
        %793 = vst.msk [vmem:[%s792] sm:$0xff] %vm336, %v791
        %v794 = vpack.c.bf16 %v791, %v791
        %v796 = vunpack.c.l.b16 %v723
        %v797 = vpack.c.b16 %v796, %v796
        %798 = vrot.lane.b32.xlu0 %v797, 104
        %v799 = vpop.permute.xlu0 %798
        %v801 = vsel %vm336, %v794, 0
        %v804 = vsel %vm403, %v799, 0
        %806 = vmatprep.subr.bf16.mxu0 0
        %807 = vmatpush1.bf16.msra.mxu0 %v804
        %808 = vmatprep.subr.bf16.mxu0 0
        %809 = vmatpush1.bf16.msra.mxu0 0
        %810 = vmatprep.subr.bf16.mxu0 0
        %811 = vmatpush1.bf16.msra.mxu0 0
        %812 = vmatprep.subr.bf16.mxu0 0
        %813 = vmatpush1.bf16.msra.mxu0 0
        %814 = vmatprep.subr.bf16.mxu0 0
        %815 = vmatpush1.bf16.msra.mxu0 0
        %816 = vmatprep.subr.bf16.mxu0 0
        %817 = vmatpush1.bf16.msra.mxu0 0
        %818 = vmatprep.subr.bf16.mxu0 0
        %819 = vmatpush1.bf16.msra.mxu0 0
        %820 = vmatprep.subr.bf16.mxu0 0
        %821 = vmatpush1.bf16.msra.mxu0 0
        %822 = vmatprep.subr.bf16.mxu0 0
        %823 = vmatpush1.bf16.msra.mxu0 0
        %824 = vmatprep.subr.bf16.mxu0 0
        %825 = vmatpush1.bf16.msra.mxu0 0
        %826 = vmatprep.subr.bf16.mxu0 0
        %827 = vmatpush1.bf16.msra.mxu0 0
        %828 = vmatprep.subr.bf16.mxu0 0
        %829 = vmatpush1.bf16.msra.mxu0 0
        %830 = vmatprep.subr.bf16.mxu0 0
        %831 = vmatpush1.bf16.msra.mxu0 0
        %832 = vmatprep.subr.bf16.mxu0 0
        %833 = vmatpush1.bf16.msra.mxu0 0
        %834 = vmatprep.subr.bf16.mxu0 0
        %835 = vmatpush1.bf16.msra.mxu0 0
        %836 = vmatprep.subr.bf16.mxu0 0
        %837 = vmatpush1.bf16.msra.mxu0 0
        %838 = vmatprep.mubr.bf16.mxu0 0
        %839 = vmatmul.mubr.bf16.gmra.mrb[0].mxu0 %v801
        %v840 = vpop.f32.mrb[0].mxu0
        %v841 = vadd.f32 0.0, %v840
        %v842 = vpop.f32.mrb[0].mxu0
        %v843 = vpop.f32.mrb[0].mxu0
        %v844 = vpop.f32.mrb[0].mxu0
        %845 = vdwg.mxu0
        %v846 = vpack.c.bf16 %v841, %v841
        %v848 = vunpack.c.l.b16 %v846
        %v849 = vpack.c.b16 %v848, %v848
        %850 = vrot.lane.b32.xlu0 %v849, 24
        %v851 = vpop.permute.xlu0 %850
        %vm853 = vcmask 257216
        %854 = vst.msk [vmem:[%s325] sm:$0xf] %vm853, %v851
        %p855 = scmp.lt.s32.totalorder %s24, 1
        %s856 = scalar_select %p855, %s24, 1
        %p857 = scmp.lt.s32.totalorder %s25, 0
        %s858 = scalar_select %p857, %s25, 0
        %s859 = sadd.s32 %s858, %s856
        %s860 = smul.addr %s859, 4
        %s861 = scalar_lea.vmem %s4, %s860
        %s862 = sand.u32 %s178, 1
        %s863 = scalar_lea.sflag [#allocation3], %s862
        %s864 = sand.u32 %s178, 1
        %s865 = smul.addr %s864, 32
        %s866 = scalar_lea.vmem [#allocation2], %s865
        // Predicated region
        $region37: #{multi_head_attention.4} parent=35 // pred_check
          %p867 = pneg %p160
        $region38: #{multi_head_attention.4} parent=35 // pred_check_branch
          %869 = sbr.rel (%p867) target = $region40
        $region39: #{multi_head_attention.4} parent=35 // pred_region
          _
        $region40: #{multi_head_attention.4} parent=35 // pred_fallthru
          _
        // Predicated region
        $region41: #{multi_head_attention.4} parent=35 // pred_check
          %p870 = pneg %p188
        $region42: #{multi_head_attention.4} parent=35 // pred_check_branch
          %872 = sbr.rel (%p870) target = $region44
        $region43: #{multi_head_attention.4} parent=35 // pred_region
          %s874 = ssub.s32 512, 512
          %875 = vsyncadd %s863, %s874
          %s876 = sadd.s32 %s25, %s24
          %s877 = smul.addr %s876, 128
          %s878 = scalar_lea.hbm %s5, %s877
          %s879 = sshll.u32 %s866, 4
          %s880 = int_to_ptr.vmem [resolvable:$true] %s879
          %885 = dma.vmem_to_hbm [thread:$0]  %s880, 512, %s878, %s863, 128, 256, 8
        $region44: #{multi_head_attention.4} parent=35 // pred_fallthru
          _
      $region36: #{multi_head_attention.4} parent=5 // pred_fallthru
        _
      %p886 = scmp.le.s32.totalorder 2, %s15
      // Predicated region
      $region45: #{multi_head_attention.4} parent=5 // pred_check
        %p887 = pneg %p886
      $region46: #{multi_head_attention.4} parent=5 // pred_check_branch
        %889 = sbr.rel (%p887) target = $region48
      $region47: #{multi_head_attention.4} parent=5 // pred_region
        %s890 = ssub.s32 %s15, 2
        // Predicated region
        $region49: #{multi_head_attention.4} parent=47 // pred_check
          %p891 = pneg %p166
        $region50: #{multi_head_attention.4} parent=47 // pred_check_branch
          %893 = sbr.rel (%p891) target = $region52
        $region51: #{multi_head_attention.4} parent=47 // pred_region
          %p894 = scmp.lt.s32.totalorder %s26, 1
          %s895 = scalar_select %p894, %s26, 1
          %p896 = scmp.lt.s32.totalorder %s27, 0
          %s897 = scalar_select %p896, %s27, 0
          %s898 = sadd.s32 %s897, %s895
          %s899 = smul.addr %s898, 4
          %s900 = scalar_lea.vmem %s4, %s899
        $region52: #{multi_head_attention.4} parent=47 // pred_fallthru
          _
        // Predicated region
        $region53: #{multi_head_attention.4} parent=47 // pred_check
          %p901 = pneg %p194
        $region54: #{multi_head_attention.4} parent=47 // pred_check_branch
          %903 = sbr.rel (%p901) target = $region56
        $region55: #{multi_head_attention.4} parent=47 // pred_region
          %s904 = sand.u32 %s179, 1
          %s905 = scalar_lea.sflag [#allocation3], %s904
          %s906 = sand.u32 %s179, 1
          %s907 = smul.addr %s906, 32
          %s908 = scalar_lea.vmem [#allocation2], %s907
          %909 = dma.done %s905, 512
        $region56: #{multi_head_attention.4} parent=47 // pred_fallthru
          _
      $region48: #{multi_head_attention.4} parent=5 // pred_fallthru
        _
    $region6: #{multi_head_attention.4} parent=1 // loop_footer
      %s19 = sadd.s32 1, %s15
    $region7: #{multi_head_attention.4} parent=1 // loop_footer_branch
      %14 = sbr.rel target = $region3
    $region8: #{multi_head_attention.4} parent=1 // loop_exit
      _
    %910 = vsyncpa [#allocation3], 1
    %s911 = scalar_lea.sflag [#allocation3], 1
    %912 = vsyncpa %s911, 1

</llo_original>
